<compile_context>
chip_gen: v7x
topology: tpu7x:2x2x1
jax: 0.10.0
libtpu: 0.0.40
codegen_flags: <defaults>
</compile_context>

<pallas_src>
import jax
import jax.numpy as jnp
from jax.experimental import pallas as pl
from jax.experimental.pallas import tpu as pltpu


# ----------------------------------------------------------------------------
# Model configuration (small but tile-friendly: features multiples of 128).
# ----------------------------------------------------------------------------
BERT_HIDDEN = 128      # bert.config.hidden_size
D_MODEL = 128          # marian.config.d_model
D_FFN = 256
VOCAB_SRC = 256
VOCAB_TGT = 256
PAD_ID = 0             # also used as decoder_start_token_id
IGNORE_ID = -100       # HF CrossEntropyLoss ignore_index
MXU_DTYPE = jnp.bfloat16
LN_EPS = 1e-12
VOCAB_TILE_MAX = 512   # fat vocab tile: amortizes per-grid-step overhead


def _row_tile(M, tm_max=256, min_tile=16):
    """Row-tile: as fat as possible, a multiple of 16 (full bf16 sublane tile),
    and split so the M grid axis has >=2 'parallel' blocks when M allows —
    keeps the second TensorCore busy on v7x (v5e/v6e are single-TC)."""
    if M <= min_tile:
        return M
    tm = min(tm_max, M)
    if M // tm < 2:
        half = (M // 2) // min_tile * min_tile
        if half >= min_tile and M % half == 0:
            tm = half
    while M % tm:
        tm -= min_tile
    return max(tm, min_tile)


# ----------------------------------------------------------------------------
# Kernel 1: fused encoder FFN block.
#   up-proj + GELU + down-proj + residual + LayerNorm(gamma, beta), all in one
#   grid step; the GELU intermediate stays in VMEM/vregs.  bf16 output.
# ----------------------------------------------------------------------------
def _make_encoder_ffn_kernel(eps):
    def kernel(x_ref, w1_ref, b1_ref, w2_ref, b2_ref, g_ref, beta_ref, o_ref):
        x = x_ref[...]                                            # [tm, H] bf16
        # FFN up-proj + GELU (f32 accumulate on the MXU).
        h = jnp.dot(x, w1_ref[...],
                    preferred_element_type=jnp.float32) + b1_ref[...]
        # TODO(synk): HF BERT uses exact erf GELU; tanh approximation here.
        h = jax.nn.gelu(h)
        # FFN down-proj + residual + LayerNorm, f32 throughout.
        y = jnp.dot(h.astype(w2_ref.dtype), w2_ref[...],
                    preferred_element_type=jnp.float32) + b2_ref[...]
        y = y + x.astype(jnp.float32)
        mu = jnp.mean(y, axis=-1, keepdims=True)
        var = jnp.mean(jnp.square(y - mu), axis=-1, keepdims=True)
        y = (y - mu) * jax.lax.rsqrt(var + eps) * g_ref[...] + beta_ref[...]
        o_ref[...] = y.astype(o_ref.dtype)                        # bf16 store
    return kernel


def pallas_encoder_ffn_block(x, w1, b1, w2, b2, gamma, beta, *, eps=LN_EPS):
    M, H = x.shape
    F = w1.shape[1]
    tm = _row_tile(M)
    return pl.pallas_call(
        _make_encoder_ffn_kernel(eps),
        out_shape=jax.ShapeDtypeStruct((M, H), MXU_DTYPE),
        grid_spec=pltpu.PrefetchScalarGridSpec(
            num_scalar_prefetch=0,
            grid=(M // tm,),
            in_specs=[
                pl.BlockSpec((tm, H), lambda i: (i, 0)),
                pl.BlockSpec((H, F), lambda i: (0, 0)),
                pl.BlockSpec((1, F), lambda i: (0, 0)),
                pl.BlockSpec((F, H), lambda i: (0, 0)),
                pl.BlockSpec((1, H), lambda i: (0, 0)),
                pl.BlockSpec((1, H), lambda i: (0, 0)),
                pl.BlockSpec((1, H), lambda i: (0, 0)),
            ],
            out_specs=pl.BlockSpec((tm, H), lambda i: (i, 0)),
        ),
        compiler_params=pltpu.CompilerParams(
            dimension_semantics=("parallel",)),
    )(x, w1, b1, w2, b2, gamma, beta)


# ----------------------------------------------------------------------------
# Kernel 2: fused cross-attention.  The encoder->d_model projection is folded
# into the KV weights at prep time.  Batch is flattened into the row dimension
# for the Q / KV / O matmuls; only the SxS score/softmax step keeps per-batch
# structure.  bf16 output.
# ----------------------------------------------------------------------------
def _cross_attn_kernel(dec_ref, enc_ref, bias_ref, wq_ref, bq_ref,
                       wkv_ref, bkv_ref, wo_ref, bo_ref, o_ref):
    B, _, S = bias_ref.shape
    D = wq_ref.shape[1]
    # TODO(synk): Marian uses multi-head attention scaled by head_dim**-0.5;
    # single-head stand-in here uses d_model**-0.5.
    scale = float(D) ** -0.5

    # Batch flattened into rows: fat [B*S, .] MXU matmuls, f32 accumulation.
    q = jnp.dot(dec_ref[...], wq_ref[...],
                preferred_element_type=jnp.float32) + bq_ref[...]
    kv = jnp.dot(enc_ref[...], wkv_ref[...],
                 preferred_element_type=jnp.float32) + bkv_ref[...]
    k = kv[:, :D]
    v = kv[:, D:]

    q3 = q.reshape(B, S, D).astype(MXU_DTYPE)
    k3 = k.reshape(B, S, D).astype(MXU_DTYPE)
    v3 = v.reshape(B, S, D).astype(MXU_DTYPE)

    scores = jnp.einsum("bqd,bkd->bqk", q3, k3,
                        preferred_element_type=jnp.float32) * scale
    scores = scores + bias_ref[...]                        # [B, 1, S] mask bias
    m = jnp.max(scores, axis=-1, keepdims=True)
    p = jnp.exp(scores - m)
    denom = jnp.sum(p, axis=-1, keepdims=True)
    attn = p * pl.reciprocal(denom, approx=True)

    ctx = jnp.einsum("bqk,bkd->bqd", attn.astype(MXU_DTYPE), v3,
                     preferred_element_type=jnp.float32)
    out = jnp.dot(ctx.reshape(B * S, D).astype(MXU_DTYPE), wo_ref[...],
                  preferred_element_type=jnp.float32) + bo_ref[...]
    o_ref[...] = out.astype(o_ref.dtype)                   # bf16 store


def pallas_cross_attention(dec_emb_flat, enc_hidden_flat, attention_mask, p):
    B, S = attention_mask.shape
    M, D = dec_emb_flat.shape
    H = enc_hidden_flat.shape[1]
    mask_bias = (1.0 - attention_mask.astype(jnp.float32)
                 ).reshape(B, 1, S) * -1e9

    return pl.pallas_call(
        _cross_attn_kernel,
        out_shape=jax.ShapeDtypeStruct((M, D), MXU_DTYPE),
        grid_spec=pltpu.PrefetchScalarGridSpec(
            num_scalar_prefetch=0,
            grid=(1,),
            in_specs=[
                pl.BlockSpec((M, D), lambda i: (0, 0)),          # dec emb (flat)
                pl.BlockSpec((M, H), lambda i: (0, 0)),          # enc hidden
                pl.BlockSpec((B, 1, S), lambda i: (0, 0, 0)),    # mask bias
                pl.BlockSpec((D, D), lambda i: (0, 0)),          # wq
                pl.BlockSpec((1, D), lambda i: (0, 0)),          # bq
                pl.BlockSpec((H, 2 * D), lambda i: (0, 0)),      # folded w_kv
                pl.BlockSpec((1, 2 * D), lambda i: (0, 0)),      # folded b_kv
                pl.BlockSpec((D, D), lambda i: (0, 0)),          # wo
                pl.BlockSpec((1, D), lambda i: (0, 0)),          # bo
            ],
            out_specs=pl.BlockSpec((M, D), lambda i: (0, 0)),
        ),
        compiler_params=pltpu.CompilerParams(
            dimension_semantics=("arbitrary",)),
    )(dec_emb_flat, enc_hidden_flat, mask_bias,
      p["wq"], p["bq"], p["wkv"], p["bkv"], p["wo"], p["bo"])


# ----------------------------------------------------------------------------
# Kernel 3: fused LM head + per-token cross-entropy with an online LSE over
# vocab tiles.  Loss math in f32; logits emitted bf16 (halves the dominant
# HBM write for a real vocab).
# ----------------------------------------------------------------------------
def _make_lmhead_xent_kernel(tv):
    def kernel(x_ref, w_ref, b_ref, lab_ref, logits_ref, nll_ref,
               m_sc, l_sc, pick_sc):
        j = pl.program_id(1)

        @pl.when(j == 0)
        def _():
            m_sc[...] = jnp.full_like(m_sc, -jnp.inf)
            l_sc[...] = jnp.zeros_like(l_sc)
            pick_sc[...] = jnp.zeros_like(pick_sc)

        logits = jnp.dot(x_ref[...], w_ref[...],
                         preferred_element_type=jnp.float32) + b_ref[...]
        logits_ref[...] = logits.astype(logits_ref.dtype)          # bf16 store

        labels = lab_ref[...]                                       # [tm, 1]
        col = jax.lax.broadcasted_iota(jnp.int32, logits.shape, 1) + j * tv
        pick_sc[...] += jnp.sum(jnp.where(col == labels, logits, 0.0),
                                axis=-1, keepdims=True)

        m_new = jnp.maximum(m_sc[...], jnp.max(logits, axis=-1, keepdims=True))
        l_sc[...] = (l_sc[...] * jnp.exp(m_sc[...] - m_new)
                     + jnp.sum(jnp.exp(logits - m_new), axis=-1, keepdims=True))
        m_sc[...] = m_new

        @pl.when(j == pl.num_programs(1) - 1)
        def _():
            nll_ref[...] = m_sc[...] + jnp.log(l_sc[...]) - pick_sc[...]

    return kernel


def pallas_lmhead_xent(x, w, b, labels):
    M, D = x.shape
    V = w.shape[1]
    tv = min(V, VOCAB_TILE_MAX)
    tm = _row_tile(M)
    assert V % tv == 0 and tv % 128 == 0 and M % tm == 0

    grid = (M // tm, V // tv)
    logits, nll = pl.pallas_call(
        _make_lmhead_xent_kernel(tv),
        out_shape=(jax.ShapeDtypeStruct((M, V), MXU_DTYPE),
                   jax.ShapeDtypeStruct((M, 1), jnp.float32)),
        grid_spec=pltpu.PrefetchScalarGridSpec(
            num_scalar_prefetch=0,
            grid=grid,
            in_specs=[
                pl.BlockSpec((tm, D), lambda i, j: (i, 0)),
                pl.BlockSpec((D, tv), lambda i, j: (0, j)),
                pl.BlockSpec((1, tv), lambda i, j: (0, j)),
                pl.BlockSpec((tm, 1), lambda i, j: (i, 0)),
            ],
            out_specs=[
                pl.BlockSpec((tm, tv), lambda i, j: (i, j)),
                pl.BlockSpec((tm, 1), lambda i, j: (i, 0)),
            ],
            scratch_shapes=[pltpu.VMEM((tm, 1), jnp.float32)] * 3,
        ),
        compiler_params=pltpu.CompilerParams(
            dimension_semantics=("parallel", "arbitrary"),
            # Explicit scoped-VMEM headroom (safe on v5e/v6e/v7x); keeps the
            # double-buffered logits+weight tiles pipelined if tm/tv grow.
            vmem_limit_bytes=32 * 1024 * 1024),
    )(x, w, b, labels.reshape(M, 1).astype(jnp.int32))
    return logits, nll


# ----------------------------------------------------------------------------
# Parameters / helpers
# ----------------------------------------------------------------------------
def init_params(key):
    def nrm(k, shape, scale=0.02):
        return scale * jax.random.normal(k, shape, dtype=jnp.float32)

    ks = jax.random.split(key, 16)
    return dict(
        # BERT stand-in
        enc_embed=nrm(ks[0], (VOCAB_SRC, BERT_HIDDEN)),
        enc_w1=nrm(ks[1], (BERT_HIDDEN, D_FFN)),
        enc_b1=jnp.zeros((D_FFN,), jnp.float32),
        enc_w2=nrm(ks[2], (D_FFN, BERT_HIDDEN)),
        enc_b2=jnp.zeros((BERT_HIDDEN,), jnp.float32),
        ln_g=jnp.ones((BERT_HIDDEN,), jnp.float32),
        ln_b=jnp.zeros((BERT_HIDDEN,), jnp.float32),
        # self.projection = nn.Linear(hidden_size, d_model)
        proj_w=nrm(ks[3], (BERT_HIDDEN, D_MODEL)),
        proj_b=jnp.zeros((D_MODEL,), jnp.float32),
        # Marian stand-in (decoder embed, cross-attn, LM head)
        dec_embed=nrm(ks[4], (VOCAB_TGT, D_MODEL)),
        wq=nrm(ks[5], (D_MODEL, D_MODEL)), bq=jnp.zeros((D_MODEL,), jnp.float32),
        wk=nrm(ks[6], (D_MODEL, D_MODEL)), bk=jnp.zeros((D_MODEL,), jnp.float32),
        wv=nrm(ks[7], (D_MODEL, D_MODEL)), bv=jnp.zeros((D_MODEL,), jnp.float32),
        wo=nrm(ks[8], (D_MODEL, D_MODEL)), bo=jnp.zeros((D_MODEL,), jnp.float32),
        lm_w=nrm(ks[9], (D_MODEL, VOCAB_TGT)),
        lm_b=jnp.zeros((VOCAB_TGT,), jnp.float32),
    )


def prepare_params(p):
    """One-time prep (outside jit): cast weights/embeddings to bf16, reshape
    biases to [1, N] f32, and fold self.projection into the fused KV weights:
        kv = (enc @ wp + bp) @ [wk|wv] + [bk|bv]
           = enc @ (wp @ [wk|wv]) + (bp @ [wk|wv] + [bk|bv])    (exact, in f32)
    """
    w_kv = jnp.concatenate([p["wk"], p["wv"]], axis=1)              # [D, 2D]
    b_kv = jnp.concatenate([p["bk"], p["bv"]], axis=0)              # [2D]
    wkv_folded = p["proj_w"] @ w_kv                                 # [H, 2D]
    bkv_folded = p["proj_b"] @ w_kv + b_kv                          # [2D]
    return dict(
        enc_embed=p["enc_embed"].astype(MXU_DTYPE),
        dec_embed=p["dec_embed"].astype(MXU_DTYPE),
        enc_w1=p["enc_w1"].astype(MXU_DTYPE),
        enc_b1=p["enc_b1"].reshape(1, -1),
        enc_w2=p["enc_w2"].astype(MXU_DTYPE),
        enc_b2=p["enc_b2"].reshape(1, -1),
        ln_g=p["ln_g"].reshape(1, -1),
        ln_b=p["ln_b"].reshape(1, -1),
        wq=p["wq"].astype(MXU_DTYPE),
        bq=p["bq"].reshape(1, -1),
        wkv=wkv_folded.astype(MXU_DTYPE),
        bkv=bkv_folded.reshape(1, -1),
        wo=p["wo"].astype(MXU_DTYPE),
        bo=p["bo"].reshape(1, -1),
        lm_w=p["lm_w"].astype(MXU_DTYPE),
        lm_b=p["lm_b"].reshape(1, -1),
    )


def _shift_tokens_right(labels, start_id, pad_id):
    # Marian builds decoder_input_ids by shifting labels right and replacing
    # ignore_index with pad.
    shifted = jnp.concatenate(
        [jnp.full((labels.shape[0], 1), start_id, labels.dtype), labels[:, :-1]],
        axis=1)
    return jnp.where(shifted == IGNORE_ID, pad_id, shifted)


# ----------------------------------------------------------------------------
# Forward pass
# ----------------------------------------------------------------------------
@jax.jit
def mbert_to_marian_forward(params, input_ids, attention_mask, labels):
    B, S = input_ids.shape
    M = B * S

    # ---- encoder_outputs = self.bert(input_ids, attention_mask) ------------
    # TODO(synk): embedding gathers stay in plain JAX (no clean Pallas gather
    # without manual DMA); full pretrained BERT stack replaced by one block.
    emb = jnp.take(params["enc_embed"], input_ids, axis=0
                   ).reshape(M, BERT_HIDDEN)                        # bf16
    hidden_states = pallas_encoder_ffn_block(
        emb, params["enc_w1"], params["enc_b1"],
        params["enc_w2"], params["enc_b2"],
        params["ln_g"], params["ln_b"])                             # bf16 [M, H]

    # ---- projection + marian(encoder_outputs=(projected,), mask, labels) ---
    # self.projection is folded into the cross-attention KV weights.
    dec_ids = _shift_tokens_right(labels, PAD_ID, PAD_ID)
    dec_emb = jnp.take(params["dec_embed"], dec_ids.reshape(M), axis=0)  # bf16
    attn_out = pallas_cross_attention(
        dec_emb, hidden_states, attention_mask, params)             # bf16 [M, D]

    # ---- LM head + token cross-entropy (fused, vocab-tiled) ----------------
    logits, nll = pallas_lmhead_xent(
        attn_out, params["lm_w"], params["lm_b"], labels.reshape(M))

    valid = (labels.reshape(M, 1) != IGNORE_ID).astype(jnp.float32)
    loss = jnp.sum(nll * valid) / jnp.maximum(jnp.sum(valid), 1.0)
    return loss, logits.reshape(B, S, VOCAB_TGT)


if __name__ == "__main__":
    key = jax.random.PRNGKey(0)
    pkey, ikey, lkey = jax.random.split(key, 3)

    params = prepare_params(init_params(pkey))   # one-time bf16 prep + KV fold

    B, S = 2, 8
    input_ids = jax.random.randint(ikey, (B, S), 1, VOCAB_SRC, dtype=jnp.int32)
    labels = jax.random.randint(lkey, (B, S), 1, VOCAB_TGT, dtype=jnp.int32)
    attention_mask = jnp.ones((B, S), jnp.int32).at[1, -2:].set(0)

    loss, logits = mbert_to_marian_forward(
        params, input_ids, attention_mask, labels
    )
    jax.block_until_ready((loss, logits))

    assert logits.shape == (B, S, VOCAB_TGT)
    assert jnp.isfinite(loss)
    print("KERNEL_OK")
</pallas_src>

<mosaic_0001>
module attributes {stable_mosaic.version = 11 : i64} {
  func.func @kernel(%arg0: i32, %arg1: memref<16x128xbf16, #tpu.memory_space<vmem>>, %arg2: memref<128x256xbf16, #tpu.memory_space<vmem>>, %arg3: memref<1x256xf32, #tpu.memory_space<vmem>>, %arg4: memref<256x128xbf16, #tpu.memory_space<vmem>>, %arg5: memref<1x128xf32, #tpu.memory_space<vmem>>, %arg6: memref<1x128xf32, #tpu.memory_space<vmem>>, %arg7: memref<1x128xf32, #tpu.memory_space<vmem>>, %arg8: memref<16x128xbf16, #tpu.memory_space<vmem>>) attributes {dimension_semantics = [#tpu.dimension_semantics<parallel>], iteration_bounds = array<i64: 1>, scalar_prefetch = 0 : i64, scratch_operands = 0 : i64, tpu.core_type = #tpu.core_type<tc>, window_params = [{transform_indices = @transform_0, window_bounds = array<i64: 16, 128>}, {pipeline_mode = #tpu.pipeline_mode<synchronous>, transform_indices = @transform_1, window_bounds = array<i64: 128, 256>}, {pipeline_mode = #tpu.pipeline_mode<synchronous>, transform_indices = @transform_2, window_bounds = array<i64: 1, 256>}, {pipeline_mode = #tpu.pipeline_mode<synchronous>, transform_indices = @transform_3, window_bounds = array<i64: 256, 128>}, {pipeline_mode = #tpu.pipeline_mode<synchronous>, transform_indices = @transform_4, window_bounds = array<i64: 1, 128>}, {pipeline_mode = #tpu.pipeline_mode<synchronous>, transform_indices = @transform_5, window_bounds = array<i64: 1, 128>}, {pipeline_mode = #tpu.pipeline_mode<synchronous>, transform_indices = @transform_6, window_bounds = array<i64: 1, 128>}, {transform_indices = @transform_7, window_bounds = array<i64: 16, 128>}]} {
    %c0 = arith.constant 0 : index
    %c0_0 = arith.constant 0 : index
    %0 = vector.load %arg1[%c0, %c0_0] : memref<16x128xbf16, #tpu.memory_space<vmem>>, vector<16x128xbf16>
    %c0_1 = arith.constant 0 : index
    %c0_2 = arith.constant 0 : index
    %1 = vector.load %arg2[%c0_1, %c0_2] : memref<128x256xbf16, #tpu.memory_space<vmem>>, vector<128x256xbf16>
    %cst = arith.constant dense<0.000000e+00> : vector<16x256xf32>
    %2 = tpu.matmul %0, %1, %cst {dimension_numbers = #tpu.dot_dimension_numbers<[1], [0], [0], [1], [0, 0, 1, 1], [], []>} : vector<16x128xbf16>, vector<128x256xbf16>, vector<16x256xf32> -> vector<16x256xf32>
    %c0_3 = arith.constant 0 : index
    %c0_4 = arith.constant 0 : index
    %3 = vector.load %arg3[%c0_3, %c0_4] : memref<1x256xf32, #tpu.memory_space<vmem>>, vector<1x256xf32>
    %4 = vector.broadcast %3 : vector<1x256xf32> to vector<16x256xf32>
    %5 = arith.addf %2, %4 : vector<16x256xf32>
    %6 = arith.mulf %5, %5 : vector<16x256xf32>
    %7 = arith.mulf %5, %6 : vector<16x256xf32>
    %cst_5 = arith.constant 4.471500e-02 : f32
    %8 = vector.broadcast %cst_5 : f32 to vector<16x256xf32>
    %9 = arith.mulf %8, %7 : vector<16x256xf32>
    %10 = arith.addf %5, %9 : vector<16x256xf32>
    %cst_6 = arith.constant 0.797884583 : f32
    %11 = vector.broadcast %cst_6 : f32 to vector<16x256xf32>
    %12 = arith.mulf %11, %10 : vector<16x256xf32>
    %13 = math.tanh %12 : vector<16x256xf32>
    %cst_7 = arith.constant 1.000000e+00 : f32
    %14 = vector.broadcast %cst_7 : f32 to vector<16x256xf32>
    %15 = arith.addf %14, %13 : vector<16x256xf32>
    %cst_8 = arith.constant 5.000000e-01 : f32
    %16 = vector.broadcast %cst_8 : f32 to vector<16x256xf32>
    %17 = arith.mulf %16, %15 : vector<16x256xf32>
    %18 = arith.mulf %5, %17 : vector<16x256xf32>
    %19 = arith.truncf %18 : vector<16x256xf32> to vector<16x256xbf16>
    %c0_9 = arith.constant 0 : index
    %c0_10 = arith.constant 0 : index
    %20 = vector.load %arg4[%c0_9, %c0_10] : memref<256x128xbf16, #tpu.memory_space<vmem>>, vector<256x128xbf16>
    %cst_11 = arith.constant dense<0.000000e+00> : vector<16x128xf32>
    %21 = tpu.matmul %19, %20, %cst_11 {dimension_numbers = #tpu.dot_dimension_numbers<[1], [0], [0], [1], [0, 0, 1, 1], [], []>} : vector<16x256xbf16>, vector<256x128xbf16>, vector<16x128xf32> -> vector<16x128xf32>
    %c0_12 = arith.constant 0 : index
    %c0_13 = arith.constant 0 : index
    %22 = vector.load %arg5[%c0_12, %c0_13] : memref<1x128xf32, #tpu.memory_space<vmem>>, vector<1x128xf32>
    %23 = vector.broadcast %22 : vector<1x128xf32> to vector<16x128xf32>
    %24 = arith.addf %21, %23 : vector<16x128xf32>
    %25 = arith.extf %0 : vector<16x128xbf16> to vector<16x128xf32>
    %26 = arith.addf %24, %25 : vector<16x128xf32>
    %cst_14 = arith.constant dense<0.000000e+00> : vector<16xf32>
    %27 = vector.multi_reduction <add>, %26, %cst_14 [1] : vector<16x128xf32> to vector<16xf32>
    %28 = vector.shape_cast %27 : vector<16xf32> to vector<16x1xf32>
    %cst_15 = arith.constant 1.280000e+02 : f32
    %29 = vector.broadcast %cst_15 : f32 to vector<16x1xf32>
    %30 = arith.divf %28, %29 : vector<16x1xf32>
    %31 = vector.broadcast %30 : vector<16x1xf32> to vector<16x128xf32>
    %32 = arith.subf %26, %31 : vector<16x128xf32>
    %33 = arith.mulf %32, %32 : vector<16x128xf32>
    %cst_16 = arith.constant dense<0.000000e+00> : vector<16xf32>
    %34 = vector.multi_reduction <add>, %33, %cst_16 [1] : vector<16x128xf32> to vector<16xf32>
    %35 = vector.shape_cast %34 : vector<16xf32> to vector<16x1xf32>
    %cst_17 = arith.constant 1.280000e+02 : f32
    %36 = vector.broadcast %cst_17 : f32 to vector<16x1xf32>
    %37 = arith.divf %35, %36 : vector<16x1xf32>
    %38 = vector.broadcast %30 : vector<16x1xf32> to vector<16x128xf32>
    %39 = arith.subf %26, %38 : vector<16x128xf32>
    %cst_18 = arith.constant 9.99999996E-13 : f32
    %40 = vector.broadcast %cst_18 : f32 to vector<16x1xf32>
    %41 = arith.addf %37, %40 : vector<16x1xf32>
    %42 = math.rsqrt %41 : vector<16x1xf32>
    %43 = vector.broadcast %42 : vector<16x1xf32> to vector<16x128xf32>
    %44 = arith.mulf %39, %43 : vector<16x128xf32>
    %c0_19 = arith.constant 0 : index
    %c0_20 = arith.constant 0 : index
    %45 = vector.load %arg6[%c0_19, %c0_20] : memref<1x128xf32, #tpu.memory_space<vmem>>, vector<1x128xf32>
    %46 = vector.broadcast %45 : vector<1x128xf32> to vector<16x128xf32>
    %47 = arith.mulf %44, %46 : vector<16x128xf32>
    %c0_21 = arith.constant 0 : index
    %c0_22 = arith.constant 0 : index
    %48 = vector.load %arg7[%c0_21, %c0_22] : memref<1x128xf32, #tpu.memory_space<vmem>>, vector<1x128xf32>
    %49 = vector.broadcast %48 : vector<1x128xf32> to vector<16x128xf32>
    %50 = arith.addf %47, %49 : vector<16x128xf32>
    %51 = arith.truncf %50 : vector<16x128xf32> to vector<16x128xbf16>
    %c0_23 = arith.constant 0 : index
    %c0_24 = arith.constant 0 : index
    %52 = vector.load %arg8[%c0_23, %c0_24] : memref<16x128xbf16, #tpu.memory_space<vmem>>, vector<16x128xbf16>
    tpu.vector_store %arg8[%c0_23, %c0_24], %51 {strides = array<i32>} : memref<16x128xbf16, #tpu.memory_space<vmem>>, vector<16x128xbf16>,
    return
  }
  func.func @transform_0(%arg0: i32) -> (i32, i32) {
    %c0_i32 = arith.constant 0 : i32
    %c0_i32_0 = arith.constant 0 : i32
    return %arg0, %c0_i32 : i32, i32
  }
  func.func @transform_1(%arg0: i32) -> (i32, i32) {
    %c0_i32 = arith.constant 0 : i32
    %c0_i32_0 = arith.constant 0 : i32
    %c0_i32_1 = arith.constant 0 : i32
    return %c0_i32, %c0_i32_0 : i32, i32
  }
  func.func @transform_2(%arg0: i32) -> (i32, i32) {
    %c0_i32 = arith.constant 0 : i32
    %c0_i32_0 = arith.constant 0 : i32
    %c0_i32_1 = arith.constant 0 : i32
    return %c0_i32, %c0_i32_0 : i32, i32
  }
  func.func @transform_3(%arg0: i32) -> (i32, i32) {
    %c0_i32 = arith.constant 0 : i32
    %c0_i32_0 = arith.constant 0 : i32
    %c0_i32_1 = arith.constant 0 : i32
    return %c0_i32, %c0_i32_0 : i32, i32
  }
  func.func @transform_4(%arg0: i32) -> (i32, i32) {
    %c0_i32 = arith.constant 0 : i32
    %c0_i32_0 = arith.constant 0 : i32
    %c0_i32_1 = arith.constant 0 : i32
    return %c0_i32, %c0_i32_0 : i32, i32
  }
  func.func @transform_5(%arg0: i32) -> (i32, i32) {
    %c0_i32 = arith.constant 0 : i32
    %c0_i32_0 = arith.constant 0 : i32
    %c0_i32_1 = arith.constant 0 : i32
    return %c0_i32, %c0_i32_0 : i32, i32
  }
  func.func @transform_6(%arg0: i32) -> (i32, i32) {
    %c0_i32 = arith.constant 0 : i32
    %c0_i32_0 = arith.constant 0 : i32
    %c0_i32_1 = arith.constant 0 : i32
    return %c0_i32, %c0_i32_0 : i32, i32
  }
  func.func @transform_7(%arg0: i32) -> (i32, i32) {
    %c0_i32 = arith.constant 0 : i32
    %c0_i32_0 = arith.constant 0 : i32
    return %arg0, %c0_i32 : i32, i32
  }
}

module attributes {stable_mosaic.version = 11 : i64} {
  func.func @_cross_attn_kernel(%arg0: i32, %arg1: memref<16x128xbf16, #tpu.memory_space<vmem>>, %arg2: memref<16x128xbf16, #tpu.memory_space<vmem>>, %arg3: memref<2x1x8xf32, #tpu.memory_space<vmem>>, %arg4: memref<128x128xbf16, #tpu.memory_space<vmem>>, %arg5: memref<1x128xf32, #tpu.memory_space<vmem>>, %arg6: memref<128x256xbf16, #tpu.memory_space<vmem>>, %arg7: memref<1x256xf32, #tpu.memory_space<vmem>>, %arg8: memref<128x128xbf16, #tpu.memory_space<vmem>>, %arg9: memref<1x128xf32, #tpu.memory_space<vmem>>, %arg10: memref<16x128xbf16, #tpu.memory_space<vmem>>) attributes {dimension_semantics = [#tpu.dimension_semantics<arbitrary>], iteration_bounds = array<i64: 1>, scalar_prefetch = 0 : i64, scratch_operands = 0 : i64, tpu.core_type = #tpu.core_type<tc>, window_params = [{pipeline_mode = #tpu.pipeline_mode<synchronous>, transform_indices = @transform_0, window_bounds = array<i64: 16, 128>}, {pipeline_mode = #tpu.pipeline_mode<synchronous>, transform_indices = @transform_1, window_bounds = array<i64: 16, 128>}, {pipeline_mode = #tpu.pipeline_mode<synchronous>, transform_indices = @transform_2, window_bounds = array<i64: 2, 1, 8>}, {pipeline_mode = #tpu.pipeline_mode<synchronous>, transform_indices = @transform_3, window_bounds = array<i64: 128, 128>}, {pipeline_mode = #tpu.pipeline_mode<synchronous>, transform_indices = @transform_4, window_bounds = array<i64: 1, 128>}, {pipeline_mode = #tpu.pipeline_mode<synchronous>, transform_indices = @transform_5, window_bounds = array<i64: 128, 256>}, {pipeline_mode = #tpu.pipeline_mode<synchronous>, transform_indices = @transform_6, window_bounds = array<i64: 1, 256>}, {pipeline_mode = #tpu.pipeline_mode<synchronous>, transform_indices = @transform_7, window_bounds = array<i64: 128, 128>}, {pipeline_mode = #tpu.pipeline_mode<synchronous>, transform_indices = @transform_8, window_bounds = array<i64: 1, 128>}, {pipeline_mode = #tpu.pipeline_mode<synchronous>, transform_indices = @transform_9, window_bounds = array<i64: 16, 128>}]} {
    %c0 = arith.constant 0 : index
    %c0_0 = arith.constant 0 : index
    %0 = vector.load %arg1[%c0, %c0_0] : memref<16x128xbf16, #tpu.memory_space<vmem>>, vector<16x128xbf16>
    %c0_1 = arith.constant 0 : index
    %c0_2 = arith.constant 0 : index
    %1 = vector.load %arg4[%c0_1, %c0_2] : memref<128x128xbf16, #tpu.memory_space<vmem>>, vector<128x128xbf16>
    %cst = arith.constant dense<0.000000e+00> : vector<16x128xf32>
    %2 = tpu.matmul %0, %1, %cst {dimension_numbers = #tpu.dot_dimension_numbers<[1], [0], [0], [1], [0, 0, 1, 1], [], []>} : vector<16x128xbf16>, vector<128x128xbf16>, vector<16x128xf32> -> vector<16x128xf32>
    %c0_3 = arith.constant 0 : index
    %c0_4 = arith.constant 0 : index
    %3 = vector.load %arg5[%c0_3, %c0_4] : memref<1x128xf32, #tpu.memory_space<vmem>>, vector<1x128xf32>
    %4 = vector.broadcast %3 : vector<1x128xf32> to vector<16x128xf32>
    %5 = arith.addf %2, %4 : vector<16x128xf32>
    %c0_5 = arith.constant 0 : index
    %c0_6 = arith.constant 0 : index
    %6 = vector.load %arg2[%c0_5, %c0_6] : memref<16x128xbf16, #tpu.memory_space<vmem>>, vector<16x128xbf16>
    %c0_7 = arith.constant 0 : index
    %c0_8 = arith.constant 0 : index
    %7 = vector.load %arg6[%c0_7, %c0_8] : memref<128x256xbf16, #tpu.memory_space<vmem>>, vector<128x256xbf16>
    %cst_9 = arith.constant dense<0.000000e+00> : vector<16x256xf32>
    %8 = tpu.matmul %6, %7, %cst_9 {dimension_numbers = #tpu.dot_dimension_numbers<[1], [0], [0], [1], [0, 0, 1, 1], [], []>} : vector<16x128xbf16>, vector<128x256xbf16>, vector<16x256xf32> -> vector<16x256xf32>
    %c0_10 = arith.constant 0 : index
    %c0_11 = arith.constant 0 : index
    %9 = vector.load %arg7[%c0_10, %c0_11] : memref<1x256xf32, #tpu.memory_space<vmem>>, vector<1x256xf32>
    %10 = vector.broadcast %9 : vector<1x256xf32> to vector<16x256xf32>
    %11 = arith.addf %8, %10 : vector<16x256xf32>
    %12 = vector.extract_strided_slice %11 {offsets = [0, 0], sizes = [16, 128], strides = [1, 1]} : vector<16x256xf32> to vector<16x128xf32>
    %13 = vector.extract_strided_slice %11 {offsets = [0, 128], sizes = [16, 128], strides = [1, 1]} : vector<16x256xf32> to vector<16x128xf32>
    %14 = vector.shape_cast %5 : vector<16x128xf32> to vector<2x8x128xf32>
    %15 = arith.truncf %14 : vector<2x8x128xf32> to vector<2x8x128xbf16>
    %16 = vector.shape_cast %12 : vector<16x128xf32> to vector<2x8x128xf32>
    %17 = arith.truncf %16 : vector<2x8x128xf32> to vector<2x8x128xbf16>
    %18 = vector.shape_cast %13 : vector<16x128xf32> to vector<2x8x128xf32>
    %19 = arith.truncf %18 : vector<2x8x128xf32> to vector<2x8x128xbf16>
    "tpu.trace_start"() <{level = 10 : i32, message = "bqd,bkd->bqk"}> : () -> ()
    %cst_12 = arith.constant dense<0.000000e+00> : vector<2x8x8xf32>
    %20 = tpu.matmul %15, %17, %cst_12 {dimension_numbers = #tpu.dot_dimension_numbers<[2], [2], [1], [1], [0, 0, 0, 1, 1, 1], [0], [0]>} : vector<2x8x128xbf16>, vector<2x8x128xbf16>, vector<2x8x8xf32> -> vector<2x8x8xf32>
    "tpu.trace_stop"() : () -> ()
    %cst_13 = arith.constant 0.0883883461 : f32
    %21 = vector.broadcast %cst_13 : f32 to vector<2x8x8xf32>
    %22 = arith.mulf %20, %21 : vector<2x8x8xf32>
    %c0_14 = arith.constant 0 : index
    %c0_15 = arith.constant 0 : index
    %c0_16 = arith.constant 0 : index
    %23 = vector.load %arg3[%c0_14, %c0_15, %c0_16] : memref<2x1x8xf32, #tpu.memory_space<vmem>>, vector<2x1x8xf32>
    %24 = vector.broadcast %23 : vector<2x1x8xf32> to vector<2x8x8xf32>
    %25 = arith.addf %22, %24 : vector<2x8x8xf32>
    %cst_17 = arith.constant dense<0xFF800000> : vector<2x8xf32>
    %26 = vector.multi_reduction <maximumf>, %25, %cst_17 [2] : vector<2x8x8xf32> to vector<2x8xf32>
    %27 = vector.shape_cast %26 : vector<2x8xf32> to vector<2x8x1xf32>
    %28 = vector.broadcast %27 : vector<2x8x1xf32> to vector<2x8x8xf32>
    %29 = arith.subf %25, %28 : vector<2x8x8xf32>
    %30 = math.exp %29 : vector<2x8x8xf32>
    %cst_18 = arith.constant dense<0.000000e+00> : vector<2x8xf32>
    %31 = vector.multi_reduction <add>, %30, %cst_18 [2] : vector<2x8x8xf32> to vector<2x8xf32>
    %32 = vector.shape_cast %31 : vector<2x8xf32> to vector<2x8x1xf32>
    %33 = tpu.reciprocal %32 {approx = true} : vector<2x8x1xf32> -> vector<2x8x1xf32>
    %34 = vector.broadcast %33 : vector<2x8x1xf32> to vector<2x8x8xf32>
    %35 = arith.mulf %30, %34 : vector<2x8x8xf32>
    %36 = arith.truncf %35 : vector<2x8x8xf32> to vector<2x8x8xbf16>
    "tpu.trace_start"() <{level = 10 : i32, message = "bqk,bkd->bqd"}> : () -> ()
    %cst_19 = arith.constant dense<0.000000e+00> : vector<2x8x128xf32>
    %37 = tpu.matmul %36, %19, %cst_19 {dimension_numbers = #tpu.dot_dimension_numbers<[2], [1], [1], [2], [0, 0, 0, 1, 1, 2], [0], [0]>} : vector<2x8x8xbf16>, vector<2x8x128xbf16>, vector<2x8x128xf32> -> vector<2x8x128xf32>
    "tpu.trace_stop"() : () -> ()
    %38 = vector.shape_cast %37 : vector<2x8x128xf32> to vector<16x128xf32>
    %39 = arith.truncf %38 : vector<16x128xf32> to vector<16x128xbf16>
    %c0_20 = arith.constant 0 : index
    %c0_21 = arith.constant 0 : index
    %40 = vector.load %arg8[%c0_20, %c0_21] : memref<128x128xbf16, #tpu.memory_space<vmem>>, vector<128x128xbf16>
    %cst_22 = arith.constant dense<0.000000e+00> : vector<16x128xf32>
    %41 = tpu.matmul %39, %40, %cst_22 {dimension_numbers = #tpu.dot_dimension_numbers<[1], [0], [0], [1], [0, 0, 1, 1], [], []>} : vector<16x128xbf16>, vector<128x128xbf16>, vector<16x128xf32> -> vector<16x128xf32>
    %c0_23 = arith.constant 0 : index
    %c0_24 = arith.constant 0 : index
    %42 = vector.load %arg9[%c0_23, %c0_24] : memref<1x128xf32, #tpu.memory_space<vmem>>, vector<1x128xf32>
    %43 = vector.broadcast %42 : vector<1x128xf32> to vector<16x128xf32>
    %44 = arith.addf %41, %43 : vector<16x128xf32>
    %45 = arith.truncf %44 : vector<16x128xf32> to vector<16x128xbf16>
    %c0_25 = arith.constant 0 : index
    %c0_26 = arith.constant 0 : index
    %46 = vector.load %arg10[%c0_25, %c0_26] : memref<16x128xbf16, #tpu.memory_space<vmem>>, vector<16x128xbf16>
    tpu.vector_store %arg10[%c0_25, %c0_26], %45 {strides = array<i32>} : memref<16x128xbf16, #tpu.memory_space<vmem>>, vector<16x128xbf16>,
    return
  }
  func.func @transform_0(%arg0: i32) -> (i32, i32) {
    %c0_i32 = arith.constant 0 : i32
    %c0_i32_0 = arith.constant 0 : i32
    %c0_i32_1 = arith.constant 0 : i32
    return %c0_i32, %c0_i32_0 : i32, i32
  }
  func.func @transform_1(%arg0: i32) -> (i32, i32) {
    %c0_i32 = arith.constant 0 : i32
    %c0_i32_0 = arith.constant 0 : i32
    %c0_i32_1 = arith.constant 0 : i32
    return %c0_i32, %c0_i32_0 : i32, i32
  }
  func.func @transform_2(%arg0: i32) -> (i32, i32, i32) {
    %c0_i32 = arith.constant 0 : i32
    %c0_i32_0 = arith.constant 0 : i32
    %c0_i32_1 = arith.constant 0 : i32
    %c0_i32_2 = arith.constant 0 : i32
    return %c0_i32, %c0_i32_0, %c0_i32_1 : i32, i32, i32
  }
  func.func @transform_3(%arg0: i32) -> (i32, i32) {
    %c0_i32 = arith.constant 0 : i32
    %c0_i32_0 = arith.constant 0 : i32
    %c0_i32_1 = arith.constant 0 : i32
    return %c0_i32, %c0_i32_0 : i32, i32
  }
  func.func @transform_4(%arg0: i32) -> (i32, i32) {
    %c0_i32 = arith.constant 0 : i32
    %c0_i32_0 = arith.constant 0 : i32
    %c0_i32_1 = arith.constant 0 : i32
    return %c0_i32, %c0_i32_0 : i32, i32
  }
  func.func @transform_5(%arg0: i32) -> (i32, i32) {
    %c0_i32 = arith.constant 0 : i32
    %c0_i32_0 = arith.constant 0 : i32
    %c0_i32_1 = arith.constant 0 : i32
    return %c0_i32, %c0_i32_0 : i32, i32
  }
  func.func @transform_6(%arg0: i32) -> (i32, i32) {
    %c0_i32 = arith.constant 0 : i32
    %c0_i32_0 = arith.constant 0 : i32
    %c0_i32_1 = arith.constant 0 : i32
    return %c0_i32, %c0_i32_0 : i32, i32
  }
  func.func @transform_7(%arg0: i32) -> (i32, i32) {
    %c0_i32 = arith.constant 0 : i32
    %c0_i32_0 = arith.constant 0 : i32
    %c0_i32_1 = arith.constant 0 : i32
    return %c0_i32, %c0_i32_0 : i32, i32
  }
  func.func @transform_8(%arg0: i32) -> (i32, i32) {
    %c0_i32 = arith.constant 0 : i32
    %c0_i32_0 = arith.constant 0 : i32
    %c0_i32_1 = arith.constant 0 : i32
    return %c0_i32, %c0_i32_0 : i32, i32
  }
  func.func @transform_9(%arg0: i32) -> (i32, i32) {
    %c0_i32 = arith.constant 0 : i32
    %c0_i32_0 = arith.constant 0 : i32
    %c0_i32_1 = arith.constant 0 : i32
    return %c0_i32, %c0_i32_0 : i32, i32
  }
}

module attributes {stable_mosaic.version = 11 : i64} {
  func.func @kernel(%arg0: i32, %arg1: i32, %arg2: memref<16x128xbf16, #tpu.memory_space<vmem>>, %arg3: memref<128x256xbf16, #tpu.memory_space<vmem>>, %arg4: memref<1x256xf32, #tpu.memory_space<vmem>>, %arg5: memref<16x1xi32, #tpu.memory_space<vmem>>, %arg6: memref<16x256xbf16, #tpu.memory_space<vmem>>, %arg7: memref<16x1xf32, #tpu.memory_space<vmem>>, %arg8: memref<16x1xf32, #tpu.memory_space<vmem>>, %arg9: memref<16x1xf32, #tpu.memory_space<vmem>>, %arg10: memref<16x1xf32, #tpu.memory_space<vmem>>) attributes {dimension_semantics = [#tpu.dimension_semantics<parallel>, #tpu.dimension_semantics<arbitrary>], iteration_bounds = array<i64: 1, 1>, scalar_prefetch = 0 : i64, scratch_operands = 3 : i64, tpu.core_type = #tpu.core_type<tc>, window_params = [{transform_indices = @transform_0, window_bounds = array<i64: 16, 128>}, {transform_indices = @transform_1, window_bounds = array<i64: 128, 256>}, {transform_indices = @transform_2, window_bounds = array<i64: 1, 256>}, {transform_indices = @transform_3, window_bounds = array<i64: 16, 1>}, {transform_indices = @transform_4, window_bounds = array<i64: 16, 256>}, {transform_indices = @transform_5, window_bounds = array<i64: 16, 1>}]} {
    %c0_i32 = arith.constant 0 : i32
    %0 = arith.cmpi eq, %arg1, %c0_i32 : i32
    %1 = arith.extui %0 : i1 to i32
    %c0_i32_0 = arith.constant 0 : i32
    %2 = arith.cmpi ne, %1, %c0_i32_0 : i32
    scf.if %2 {
      %cst_30 = arith.constant 0xFF800000 : f32
      %45 = vector.broadcast %cst_30 : f32 to vector<16x1xf32>
      %c0_31 = arith.constant 0 : index
      %c0_32 = arith.constant 0 : index
      %46 = vector.load %arg8[%c0_31, %c0_32] : memref<16x1xf32, #tpu.memory_space<vmem>>, vector<16x1xf32>
      tpu.vector_store %arg8[%c0_31, %c0_32], %45 {strides = array<i32>} : memref<16x1xf32, #tpu.memory_space<vmem>>, vector<16x1xf32>,
      %cst_33 = arith.constant 0.000000e+00 : f32
      %47 = vector.broadcast %cst_33 : f32 to vector<16x1xf32>
      %c0_34 = arith.constant 0 : index
      %c0_35 = arith.constant 0 : index
      %48 = vector.load %arg9[%c0_34, %c0_35] : memref<16x1xf32, #tpu.memory_space<vmem>>, vector<16x1xf32>
      tpu.vector_store %arg9[%c0_34, %c0_35], %47 {strides = array<i32>} : memref<16x1xf32, #tpu.memory_space<vmem>>, vector<16x1xf32>,
      %cst_36 = arith.constant 0.000000e+00 : f32
      %49 = vector.broadcast %cst_36 : f32 to vector<16x1xf32>
      %c0_37 = arith.constant 0 : index
      %c0_38 = arith.constant 0 : index
      %50 = vector.load %arg10[%c0_37, %c0_38] : memref<16x1xf32, #tpu.memory_space<vmem>>, vector<16x1xf32>
      tpu.vector_store %arg10[%c0_37, %c0_38], %49 {strides = array<i32>} : memref<16x1xf32, #tpu.memory_space<vmem>>, vector<16x1xf32>,
    } else {
    }
    %c0 = arith.constant 0 : index
    %c0_1 = arith.constant 0 : index
    %3 = vector.load %arg2[%c0, %c0_1] : memref<16x128xbf16, #tpu.memory_space<vmem>>, vector<16x128xbf16>
    %c0_2 = arith.constant 0 : index
    %c0_3 = arith.constant 0 : index
    %4 = vector.load %arg3[%c0_2, %c0_3] : memref<128x256xbf16, #tpu.memory_space<vmem>>, vector<128x256xbf16>
    %cst = arith.constant dense<0.000000e+00> : vector<16x256xf32>
    %5 = tpu.matmul %3, %4, %cst {dimension_numbers = #tpu.dot_dimension_numbers<[1], [0], [0], [1], [0, 0, 1, 1], [], []>} : vector<16x128xbf16>, vector<128x256xbf16>, vector<16x256xf32> -> vector<16x256xf32>
    %c0_4 = arith.constant 0 : index
    %c0_5 = arith.constant 0 : index
    %6 = vector.load %arg4[%c0_4, %c0_5] : memref<1x256xf32, #tpu.memory_space<vmem>>, vector<1x256xf32>
    %7 = vector.broadcast %6 : vector<1x256xf32> to vector<16x256xf32>
    %8 = arith.addf %5, %7 : vector<16x256xf32>
    %9 = arith.truncf %8 : vector<16x256xf32> to vector<16x256xbf16>
    %c0_6 = arith.constant 0 : index
    %c0_7 = arith.constant 0 : index
    %10 = vector.load %arg6[%c0_6, %c0_7] : memref<16x256xbf16, #tpu.memory_space<vmem>>, vector<16x256xbf16>
    tpu.vector_store %arg6[%c0_6, %c0_7], %9 {strides = array<i32>} : memref<16x256xbf16, #tpu.memory_space<vmem>>, vector<16x256xbf16>,
    %c0_8 = arith.constant 0 : index
    %c0_9 = arith.constant 0 : index
    %11 = vector.load %arg5[%c0_8, %c0_9] : memref<16x1xi32, #tpu.memory_space<vmem>>, vector<16x1xi32>
    %12 = tpu.iota {dimensions = array<i32: 1>} : vector<16x256xi32>
    %c256_i32 = arith.constant 256 : i32
    %13 = arith.muli %arg1, %c256_i32 : i32
    %14 = vector.broadcast %13 : i32 to vector<16x256xi32>
    %15 = arith.addi %12, %14 : vector<16x256xi32>
    %c0_10 = arith.constant 0 : index
    %c0_11 = arith.constant 0 : index
    %16 = vector.load %arg10[%c0_10, %c0_11] : memref<16x1xf32, #tpu.memory_space<vmem>>, vector<16x1xf32>
    %17 = vector.broadcast %11 : vector<16x1xi32> to vector<16x256xi32>
    %18 = arith.cmpi eq, %15, %17 : vector<16x256xi32>
    %cst_12 = arith.constant 0.000000e+00 : f32
    %19 = vector.broadcast %cst_12 : f32 to vector<16x256xf32>
    %20 = arith.select %18, %8, %19 : vector<16x256xi1>, vector<16x256xf32>
    %cst_13 = arith.constant dense<0.000000e+00> : vector<16xf32>
    %21 = vector.multi_reduction <add>, %20, %cst_13 [1] : vector<16x256xf32> to vector<16xf32>
    %22 = vector.shape_cast %21 : vector<16xf32> to vector<16x1xf32>
    %23 = arith.addf %16, %22 : vector<16x1xf32>
    %c0_14 = arith.constant 0 : index
    %c0_15 = arith.constant 0 : index
    %24 = vector.load %arg10[%c0_14, %c0_15] : memref<16x1xf32, #tpu.memory_space<vmem>>, vector<16x1xf32>
    tpu.vector_store %arg10[%c0_14, %c0_15], %23 {strides = array<i32>} : memref<16x1xf32, #tpu.memory_space<vmem>>, vector<16x1xf32>,
    %c0_16 = arith.constant 0 : index
    %c0_17 = arith.constant 0 : index
    %25 = vector.load %arg8[%c0_16, %c0_17] : memref<16x1xf32, #tpu.memory_space<vmem>>, vector<16x1xf32>
    %cst_18 = arith.constant dense<0xFF800000> : vector<16xf32>
    %26 = vector.multi_reduction <maximumf>, %8, %cst_18 [1] : vector<16x256xf32> to vector<16xf32>
    %27 = vector.shape_cast %26 : vector<16xf32> to vector<16x1xf32>
    %28 = arith.maximumf %25, %27 : vector<16x1xf32>
    %c0_19 = arith.constant 0 : index
    %c0_20 = arith.constant 0 : index
    %29 = vector.load %arg9[%c0_19, %c0_20] : memref<16x1xf32, #tpu.memory_space<vmem>>, vector<16x1xf32>
    %c0_21 = arith.constant 0 : index
    %c0_22 = arith.constant 0 : index
    %30 = vector.load %arg8[%c0_21, %c0_22] : memref<16x1xf32, #tpu.memory_space<vmem>>, vector<16x1xf32>
    %31 = arith.subf %30, %28 : vector<16x1xf32>
    %32 = math.exp %31 : vector<16x1xf32>
    %33 = arith.mulf %29, %32 : vector<16x1xf32>
    %34 = vector.broadcast %28 : vector<16x1xf32> to vector<16x256xf32>
    %35 = arith.subf %8, %34 : vector<16x256xf32>
    %36 = math.exp %35 : vector<16x256xf32>
    %cst_23 = arith.constant dense<0.000000e+00> : vector<16xf32>
    %37 = vector.multi_reduction <add>, %36, %cst_23 [1] : vector<16x256xf32> to vector<16xf32>
    %38 = vector.shape_cast %37 : vector<16xf32> to vector<16x1xf32>
    %39 = arith.addf %33, %38 : vector<16x1xf32>
    %c0_24 = arith.constant 0 : index
    %c0_25 = arith.constant 0 : index
    %40 = vector.load %arg9[%c0_24, %c0_25] : memref<16x1xf32, #tpu.memory_space<vmem>>, vector<16x1xf32>
    tpu.vector_store %arg9[%c0_24, %c0_25], %39 {strides = array<i32>} : memref<16x1xf32, #tpu.memory_space<vmem>>, vector<16x1xf32>,
    %c0_26 = arith.constant 0 : index
    %c0_27 = arith.constant 0 : index
    %41 = vector.load %arg8[%c0_26, %c0_27] : memref<16x1xf32, #tpu.memory_space<vmem>>, vector<16x1xf32>
    tpu.vector_store %arg8[%c0_26, %c0_27], %28 {strides = array<i32>} : memref<16x1xf32, #tpu.memory_space<vmem>>, vector<16x1xf32>,
    %c0_i32_28 = arith.constant 0 : i32
    %42 = arith.cmpi eq, %arg1, %c0_i32_28 : i32
    %43 = arith.extui %42 : i1 to i32
    %c0_i32_29 = arith.constant 0 : i32
    %44 = arith.cmpi ne, %43, %c0_i32_29 : i32
    scf.if %44 {
      %c0_30 = arith.constant 0 : index
      %c0_31 = arith.constant 0 : index
      %45 = vector.load %arg8[%c0_30, %c0_31] : memref<16x1xf32, #tpu.memory_space<vmem>>, vector<16x1xf32>
      %c0_32 = arith.constant 0 : index
      %c0_33 = arith.constant 0 : index
      %46 = vector.load %arg9[%c0_32, %c0_33] : memref<16x1xf32, #tpu.memory_space<vmem>>, vector<16x1xf32>
      %47 = math.log %46 : vector<16x1xf32>
      %48 = arith.addf %45, %47 : vector<16x1xf32>
      %c0_34 = arith.constant 0 : index
      %c0_35 = arith.constant 0 : index
      %49 = vector.load %arg10[%c0_34, %c0_35] : memref<16x1xf32, #tpu.memory_space<vmem>>, vector<16x1xf32>
      %50 = arith.subf %48, %49 : vector<16x1xf32>
      %c0_36 = arith.constant 0 : index
      %c0_37 = arith.constant 0 : index
      %51 = vector.load %arg7[%c0_36, %c0_37] : memref<16x1xf32, #tpu.memory_space<vmem>>, vector<16x1xf32>
      tpu.vector_store %arg7[%c0_36, %c0_37], %50 {strides = array<i32>} : memref<16x1xf32, #tpu.memory_space<vmem>>, vector<16x1xf32>,
    } else {
    }
    return
  }
  func.func @transform_0(%arg0: i32, %arg1: i32) -> (i32, i32) {
    %c0_i32 = arith.constant 0 : i32
    %c0_i32_0 = arith.constant 0 : i32
    return %arg0, %c0_i32 : i32, i32
  }
  func.func @transform_1(%arg0: i32, %arg1: i32) -> (i32, i32) {
    %c0_i32 = arith.constant 0 : i32
    %c0_i32_0 = arith.constant 0 : i32
    return %c0_i32, %arg1 : i32, i32
  }
  func.func @transform_2(%arg0: i32, %arg1: i32) -> (i32, i32) {
    %c0_i32 = arith.constant 0 : i32
    %c0_i32_0 = arith.constant 0 : i32
    return %c0_i32, %arg1 : i32, i32
  }
  func.func @transform_3(%arg0: i32, %arg1: i32) -> (i32, i32) {
    %c0_i32 = arith.constant 0 : i32
    %c0_i32_0 = arith.constant 0 : i32
    return %arg0, %c0_i32 : i32, i32
  }
  func.func @transform_4(%arg0: i32, %arg1: i32) -> (i32, i32) {
    %c0_i32 = arith.constant 0 : i32
    return %arg0, %arg1 : i32, i32
  }
  func.func @transform_5(%arg0: i32, %arg1: i32) -> (i32, i32) {
    %c0_i32 = arith.constant 0 : i32
    %c0_i32_0 = arith.constant 0 : i32
    return %arg0, %c0_i32 : i32, i32
  }
}

</mosaic_0001>

<llo_original>
// kernel: mbert_to_marian_forward.5
$region0: #{mbert_to_marian_forward.5}
  #allocation0 [shape = 'u32[]', space=smem, size = 0x4, offset = 0x4, fixed_abs, tag = 'smem constant byte address 0x4 - core index']
  #allocation1 [shape = 'u32[144,128]{1,0:T(1,128)}', space=vmem, size = 0x12000, scoped, tag = 'internal scratch']
  #allocation2 [shape = 'f32[16,1]{1,0:T(8,128)}', space=vmem, size = 0x2000, scoped, tag = 'scratch operand']
  #allocation3 [shape = 'f32[16,1]{1,0:T(8,128)}', space=vmem, size = 0x2000, scoped, tag = 'scratch operand']
  #allocation4 [shape = 'f32[16,1]{1,0:T(8,128)}', space=vmem, size = 0x2000, scoped, tag = 'scratch operand']
  %s0 = inlined_call_operand.vmem [shape: bf16[16,128], index: 0, kind: input, shape index: {}]
  %s1 = inlined_call_operand.vmem [shape: bf16[128,256], index: 1, kind: input, shape index: {}]
  %s2 = inlined_call_operand.vmem [shape: f32[1,256], index: 2, kind: input, shape index: {}]
  %s3 = inlined_call_operand.vmem [shape: s32[16,1], index: 3, kind: input, shape index: {}]
  %s4 = inlined_call_operand.hbm [shape: bf16[16,256], index: 4, kind: output, shape index: {0}]
  %s5 = inlined_call_operand.vmem [shape: f32[16,1], index: 5, kind: output, shape index: {1}]
  %6 = xla_tuple %s4, %s5
  %s7 = sld [smem:[#allocation0]]
  $region42: #{mbert_to_marian_forward.5} parent=0
    _
  %s9 = ssub.s32 1, %s7
  %s10 = scalar_select 0, %s9, %s7
  $region1: #{mbert_to_marian_forward.5} parent=0
    #allocation5 [shape = 'u8[8192]{0}', space=vmem, size = 0x2000, scoped, tag = 'output window, operand 0, single buffered']
    #allocation6 [shape = 's32[1]{0}', space=sflag, size = 0x4, scoped, tag = 'scoped memory for mbert_to_marian_forward.5']
    %11 = vsyncpa [#allocation6], 0
    // Predicated region
    $region2: #{mbert_to_marian_forward.5} parent=1 // pred_check
      _
    $region3: #{mbert_to_marian_forward.5} parent=1 // pred_check_branch
      %13 = sbr.rel (0) target = $region5
    $region4: #{mbert_to_marian_forward.5} parent=1 // pred_region
      _
    $region5: #{mbert_to_marian_forward.5} parent=1 // pred_fallthru
      _
    // Predicated region
    $region6: #{mbert_to_marian_forward.5} parent=1 // pred_check
      _
    $region7: #{mbert_to_marian_forward.5} parent=1 // pred_check_branch
      %15 = sbr.rel (0) target = $region9
    $region8: #{mbert_to_marian_forward.5} parent=1 // pred_region
      _
    $region9: #{mbert_to_marian_forward.5} parent=1 // pred_fallthru
      _
    // Predicated region
    $region10: #{mbert_to_marian_forward.5} parent=1 // pred_check
      _
    $region11: #{mbert_to_marian_forward.5} parent=1 // pred_check_branch
      %17 = sbr.rel (0) target = $region13
    $region12: #{mbert_to_marian_forward.5} parent=1 // pred_region
      _
    $region13: #{mbert_to_marian_forward.5} parent=1 // pred_fallthru
      _
    // Predicated region
    $region14: #{mbert_to_marian_forward.5} parent=1 // pred_check
      _
    $region15: #{mbert_to_marian_forward.5} parent=1 // pred_check_branch
      %19 = sbr.rel (0) target = $region17
    $region16: #{mbert_to_marian_forward.5} parent=1 // pred_region
      _
    $region17: #{mbert_to_marian_forward.5} parent=1 // pred_fallthru
      _
    %p21 = scmp.eq.s32.totalorder 0, 0
    // Predicated region
    $region18: #{mbert_to_marian_forward.5} parent=1 // pred_check
      %p22 = pneg %p21
    $region19: #{mbert_to_marian_forward.5} parent=1 // pred_check_branch
      %24 = sbr.rel (%p22) target = $region21
    $region20: #{mbert_to_marian_forward.5} parent=1 // pred_region
      %vm25 = vcmask 7168
      %26 = vst.msk [vmem:[#allocation2] sm:$0xff] %vm25, -inf
      %27 = vst.msk [vmem:[#allocation2 + $0x8] sm:$0xff] %vm25, -inf
      %28 = vst.msk [vmem:[#allocation3] sm:$0xff] %vm25, 0.0
      %29 = vst.msk [vmem:[#allocation3 + $0x8] sm:$0xff] %vm25, 0.0
      %30 = vst.msk [vmem:[#allocation4] sm:$0xff] %vm25, 0.0
      %31 = vst.msk [vmem:[#allocation4 + $0x8] sm:$0xff] %vm25, 0.0
    $region21: #{mbert_to_marian_forward.5} parent=1 // pred_fallthru
      _
    %v32 = vld [vmem:[%s0] sm:$0xf]
    %v33 = vld [vmem:[%s0 + $0x4] sm:$0xf]
    %v34 = vld [vmem:[%s1] sm:$0xff]
    %v35 = vld [vmem:[%s1 + $0x8] sm:$0xff]
    %v36 = vld [vmem:[%s1 + $0x10] sm:$0xff]
    %v37 = vld [vmem:[%s1 + $0x18] sm:$0xff]
    %v38 = vld [vmem:[%s1 + $0x20] sm:$0xff]
    %v39 = vld [vmem:[%s1 + $0x28] sm:$0xff]
    %v40 = vld [vmem:[%s1 + $0x30] sm:$0xff]
    %v41 = vld [vmem:[%s1 + $0x38] sm:$0xff]
    %v42 = vld [vmem:[%s1 + $0x40] sm:$0xff]
    %v43 = vld [vmem:[%s1 + $0x48] sm:$0xff]
    %v44 = vld [vmem:[%s1 + $0x50] sm:$0xff]
    %v45 = vld [vmem:[%s1 + $0x58] sm:$0xff]
    %v46 = vld [vmem:[%s1 + $0x60] sm:$0xff]
    %v47 = vld [vmem:[%s1 + $0x68] sm:$0xff]
    %v48 = vld [vmem:[%s1 + $0x70] sm:$0xff]
    %v49 = vld [vmem:[%s1 + $0x78] sm:$0xff]
    %v50 = vld [vmem:[%s2] sm:$0x3]
    %v52 = vlaneseq
    %v53 = vshrl.u32 %v52, 7
    %v54 = vsub.s32 0, %v53
    %v55 = vrot.slane %v50, %v54
    %v56 = vlaneseq
    %v57 = vshrl.u32 %v56, 7
    %v58 = vsub.s32 1, %v57
    %v59 = vrot.slane %v50, %v58
    %v64 = vunpack.c.l.b16 %v32
    %v65 = vunpack.c.l.b16 %v33
    %v66 = vpack.c.b16 %v65, %v64
    %v84 = vunpack.c.l.b16 %v34
    %v85 = vunpack.c.h.b16 %v34
    %v86 = vunpack.c.l.b16 %v35
    %v87 = vunpack.c.h.b16 %v35
    %v88 = vunpack.c.l.b16 %v36
    %v89 = vunpack.c.h.b16 %v36
    %v90 = vunpack.c.l.b16 %v37
    %v91 = vunpack.c.h.b16 %v37
    %v92 = vunpack.c.l.b16 %v38
    %v93 = vunpack.c.h.b16 %v38
    %v94 = vunpack.c.l.b16 %v39
    %v95 = vunpack.c.h.b16 %v39
    %v96 = vunpack.c.l.b16 %v40
    %v97 = vunpack.c.h.b16 %v40
    %v98 = vunpack.c.l.b16 %v41
    %v99 = vunpack.c.h.b16 %v41
    %v100 = vunpack.c.l.b16 %v42
    %v101 = vunpack.c.h.b16 %v42
    %v102 = vunpack.c.l.b16 %v43
    %v103 = vunpack.c.h.b16 %v43
    %v104 = vunpack.c.l.b16 %v44
    %v105 = vunpack.c.h.b16 %v44
    %v106 = vunpack.c.l.b16 %v45
    %v107 = vunpack.c.h.b16 %v45
    %v108 = vunpack.c.l.b16 %v46
    %v109 = vunpack.c.h.b16 %v46
    %v110 = vunpack.c.l.b16 %v47
    %v111 = vunpack.c.h.b16 %v47
    %v112 = vunpack.c.l.b16 %v48
    %v113 = vunpack.c.h.b16 %v48
    %v114 = vunpack.c.l.b16 %v49
    %v115 = vunpack.c.h.b16 %v49
    %v116 = vpack.c.b16 %v86, %v84
    %v117 = vpack.c.b16 %v87, %v85
    %v118 = vpack.c.b16 %v90, %v88
    %v119 = vpack.c.b16 %v91, %v89
    %v120 = vpack.c.b16 %v94, %v92
    %v121 = vpack.c.b16 %v95, %v93
    %v122 = vpack.c.b16 %v98, %v96
    %v123 = vpack.c.b16 %v99, %v97
    %v124 = vpack.c.b16 %v102, %v100
    %v125 = vpack.c.b16 %v103, %v101
    %v126 = vpack.c.b16 %v106, %v104
    %v127 = vpack.c.b16 %v107, %v105
    %v128 = vpack.c.b16 %v110, %v108
    %v129 = vpack.c.b16 %v111, %v109
    %v130 = vpack.c.b16 %v114, %v112
    %v131 = vpack.c.b16 %v115, %v113
    %148 = vmatprep.subr.bf16.mxu0 %v117
    %149 = vmatpush1.bf16.msra.mxu0 %v116
    %150 = vmatprep.subr.bf16.mxu0 %v119
    %151 = vmatpush1.bf16.msra.mxu0 %v118
    %152 = vmatprep.subr.bf16.mxu0 %v121
    %153 = vmatpush1.bf16.msra.mxu0 %v120
    %154 = vmatprep.subr.bf16.mxu0 %v123
    %155 = vmatpush1.bf16.msra.mxu0 %v122
    %156 = vmatprep.subr.bf16.mxu0 %v125
    %157 = vmatpush1.bf16.msra.mxu0 %v124
    %158 = vmatprep.subr.bf16.mxu0 %v127
    %159 = vmatpush1.bf16.msra.mxu0 %v126
    %160 = vmatprep.subr.bf16.mxu0 %v129
    %161 = vmatpush1.bf16.msra.mxu0 %v128
    %162 = vmatprep.subr.bf16.mxu0 %v131
    %163 = vmatpush1.bf16.msra.mxu0 %v130
    %164 = vmatprep.subr.bf16.mxu0 0
    %165 = vmatpush1.bf16.msra.mxu0 0
    %166 = vmatprep.subr.bf16.mxu0 0
    %167 = vmatpush1.bf16.msra.mxu0 0
    %168 = vmatprep.subr.bf16.mxu0 0
    %169 = vmatpush1.bf16.msra.mxu0 0
    %170 = vmatprep.subr.bf16.mxu0 0
    %171 = vmatpush1.bf16.msra.mxu0 0
    %172 = vmatprep.subr.bf16.mxu0 0
    %173 = vmatpush1.bf16.msra.mxu0 0
    %174 = vmatprep.subr.bf16.mxu0 0
    %175 = vmatpush1.bf16.msra.mxu0 0
    %176 = vmatprep.subr.bf16.mxu0 0
    %177 = vmatpush1.bf16.msra.mxu0 0
    %178 = vmatprep.subr.bf16.mxu0 0
    %179 = vmatpush1.bf16.msra.mxu0 0
    %180 = vmatprep.mubr.bf16.mxu0 0
    %181 = vmatmul.mubr.bf16.gmra.mrb[0].mxu0 %v66
    %v182 = vpop.f32.mrb[0].mxu0
    %v183 = vadd.f32 %v55, %v182
    %v184 = vpop.f32.mrb[0].mxu0
    %v185 = vadd.f32 %v59, %v184
    %v186 = vpop.f32.mrb[0].mxu0
    %v187 = vadd.f32 %v55, %v186
    %v188 = vpop.f32.mrb[0].mxu0
    %v189 = vadd.f32 %v59, %v188
    %190 = vdwg.mxu0
    %v191 = vpack.c.bf16 %v187, %v183
    %v192 = vpack.c.bf16 %v189, %v185
    %v195 = vunpack.c.l.b16 %v191
    %v196 = vunpack.c.l.b16 %v192
    %v197 = vunpack.c.h.b16 %v191
    %v198 = vunpack.c.h.b16 %v192
    %v199 = vpack.c.b16 %v196, %v195
    %v200 = vpack.c.b16 %v198, %v197
    %203 = vst [vmem:[#allocation5] sm:$0xff] %v199
    %204 = vst [vmem:[#allocation5 + $0x8] sm:$0xff] %v200
    %v205 = vld [vmem:[%s3] sm:$0xff]
    %v206 = vld [vmem:[%s3 + $0x8] sm:$0xff]
    %v207 = vlaneseq
    %v208 = vand.u32 %v207, 127
    %v209 = vadd.s32 %v208, 128
    %s210 = smul.u32 0, 256
    %v211 = vstv %s210
    %v212 = vadd.s32 %v208, %v211
    %v213 = vadd.s32 %v209, %v211
    %v214 = vld [vmem:[#allocation4] sm:$0xff]
    %v215 = vld [vmem:[#allocation4 + $0x8] sm:$0xff]
    %216 = vset.pattern.permute.xlu0 0
    %217 = vperm.xlu0 %216, %v205
    %v218 = vpop.permute.xlu0 %217
    %219 = vset.pattern.permute.xlu0 0
    %220 = vperm.xlu0 %219, %v206
    %v221 = vpop.permute.xlu0 %220
    %vm222 = vcmp.eq.s32.totalorder %v212, %v218
    %vm223 = vcmp.eq.s32.totalorder %v213, %v218
    %vm224 = vcmp.eq.s32.totalorder %v212, %v221
    %vm225 = vcmp.eq.s32.totalorder %v213, %v221
    %v226 = vsel %vm222, %v183, 0.0
    %v227 = vsel %vm223, %v185, 0.0
    %v228 = vsel %vm224, %v187, 0.0
    %v229 = vsel %vm225, %v189, 0.0
    %v230 = vadd.f32 %v226, %v227
    %231 = vadd.xlane.f32.xlu0 %v230
    %v232 = vpop.xlane.xlu0 %231
    %v233 = vadd.f32 %v228, %v229
    %234 = vadd.xlane.f32.xlu0 %v233
    %v235 = vpop.xlane.xlu0 %234
    %v236 = vadd.f32 %v214, %v232
    %v237 = vadd.f32 %v215, %v235
    %vm238 = vcmask 7168
    %239 = vst.msk [vmem:[#allocation4] sm:$0xff] %vm238, %v236
    %240 = vst.msk [vmem:[#allocation4 + $0x8] sm:$0xff] %vm238, %v237
    %v241 = vld [vmem:[#allocation2] sm:$0xff]
    %v242 = vld [vmem:[#allocation2 + $0x8] sm:$0xff]
    %v243 = vmax.f32 %v183, %v185
    %244 = vmax.xlane.f32.xlu0 %v243
    %v245 = vpop.xlane.xlu0 %244
    %v246 = vmax.f32 %v187, %v189
    %247 = vmax.xlane.f32.xlu0 %v246
    %v248 = vpop.xlane.xlu0 %247
    %v249 = vmax.f32 %v241, %v245
    %v250 = vmax.f32 %v242, %v248
    %v251 = vld [vmem:[#allocation3] sm:$0xff]
    %v252 = vld [vmem:[#allocation3 + $0x8] sm:$0xff]
    %v253 = vsub.f32 %v241, %v249
    %v254 = vsub.f32 %v242, %v250
    %v255 = vmul.f32 %v253, 1.442695
    %v256 = vpow.pop %v255
    %v257 = vmul.f32 %v254, 1.442695
    %v258 = vpow.pop %v257
    %v259 = vmul.f32 %v251, %v256
    %v260 = vmul.f32 %v252, %v258
    %262 = vset.pattern.permute.xlu0 0
    %263 = vperm.xlu0 %262, %v249
    %v264 = vpop.permute.xlu0 %263
    %267 = vset.pattern.permute.xlu0 0
    %268 = vperm.xlu0 %267, %v250
    %v269 = vpop.permute.xlu0 %268
    %v271 = vsub.f32 %v183, %v264
    %v272 = vsub.f32 %v185, %v264
    %v273 = vsub.f32 %v187, %v269
    %v274 = vsub.f32 %v189, %v269
    %v275 = vmul.f32 %v271, 1.442695
    %v276 = vpow.pop %v275
    %v277 = vmul.f32 %v272, 1.442695
    %v278 = vpow.pop %v277
    %v279 = vmul.f32 %v273, 1.442695
    %v280 = vpow.pop %v279
    %v281 = vmul.f32 %v274, 1.442695
    %v282 = vpow.pop %v281
    %v283 = vadd.f32 %v276, %v278
    %284 = vadd.xlane.f32.xlu0 %v283
    %v285 = vpop.xlane.xlu0 %284
    %v286 = vadd.f32 %v280, %v282
    %287 = vadd.xlane.f32.xlu0 %v286
    %v288 = vpop.xlane.xlu0 %287
    %v289 = vadd.f32 %v259, %v285
    %v290 = vadd.f32 %v260, %v288
    %291 = vst.msk [vmem:[#allocation3] sm:$0xff] %vm238, %v289
    %292 = vst.msk [vmem:[#allocation3 + $0x8] sm:$0xff] %vm238, %v290
    %293 = vst.msk [vmem:[#allocation2] sm:$0xff] %vm238, %v249
    %294 = vst.msk [vmem:[#allocation2 + $0x8] sm:$0xff] %vm238, %v250
    // Predicated region
    $region22: #{mbert_to_marian_forward.5} parent=1 // pred_check
      %p295 = pneg %p21
    $region23: #{mbert_to_marian_forward.5} parent=1 // pred_check_branch
      %297 = sbr.rel (%p295) target = $region25
    $region24: #{mbert_to_marian_forward.5} parent=1 // pred_region
      %v298 = vld [vmem:[#allocation2] sm:$0xff]
      %v299 = vld [vmem:[#allocation2 + $0x8] sm:$0xff]
      %v300 = vld [vmem:[#allocation3] sm:$0xff]
      %v301 = vld [vmem:[#allocation3 + $0x8] sm:$0xff]
      %v302 = vlog2.pop %v300
      %v303 = vmul.f32 %v302, 0.6931472
      %v304 = vlog2.pop %v301
      %v305 = vmul.f32 %v304, 0.6931472
      %v306 = vadd.f32 %v298, %v303
      %v307 = vadd.f32 %v299, %v305
      %v308 = vld [vmem:[#allocation4] sm:$0xff]
      %v309 = vld [vmem:[#allocation4 + $0x8] sm:$0xff]
      %v310 = vsub.f32 %v306, %v308
      %v311 = vsub.f32 %v307, %v309
      %312 = vst.msk [vmem:[%s5] sm:$0xff] %vm238, %v310
      %313 = vst.msk [vmem:[%s5 + $0x8] sm:$0xff] %vm238, %v311
    $region25: #{mbert_to_marian_forward.5} parent=1 // pred_fallthru
      _
    // Predicated region
    $region26: #{mbert_to_marian_forward.5} parent=1 // pred_check
      _
    $region27: #{mbert_to_marian_forward.5} parent=1 // pred_check_branch
      %315 = sbr.rel (0) target = $region29
    $region28: #{mbert_to_marian_forward.5} parent=1 // pred_region
      %s317 = ssub.s32 256, 256
      %318 = vsyncadd [#allocation6], %s317
      %s319 = sshll.u32 [#allocation5], 4
      %s320 = int_to_ptr.vmem [resolvable:$true] %s319
      %325 = dma.vmem_to_hbm [thread:$0]  %s320, 256, %s4, [#allocation6], 128, 128, 8
    $region29: #{mbert_to_marian_forward.5} parent=1 // pred_fallthru
      _
    // Predicated region
    $region30: #{mbert_to_marian_forward.5} parent=1 // pred_check
      _
    $region31: #{mbert_to_marian_forward.5} parent=1 // pred_check_branch
      %327 = sbr.rel (0) target = $region33
    $region32: #{mbert_to_marian_forward.5} parent=1 // pred_region
      _
    $region33: #{mbert_to_marian_forward.5} parent=1 // pred_fallthru
      _
    // Predicated region
    $region34: #{mbert_to_marian_forward.5} parent=1 // pred_check
      _
    $region35: #{mbert_to_marian_forward.5} parent=1 // pred_check_branch
      %329 = sbr.rel (0) target = $region37
    $region36: #{mbert_to_marian_forward.5} parent=1 // pred_region
      %330 = dma.done [#allocation6], 256
    $region37: #{mbert_to_marian_forward.5} parent=1 // pred_fallthru
      _
    // Predicated region
    $region38: #{mbert_to_marian_forward.5} parent=1 // pred_check
      _
    $region39: #{mbert_to_marian_forward.5} parent=1 // pred_check_branch
      %332 = sbr.rel (0) target = $region41
    $region40: #{mbert_to_marian_forward.5} parent=1 // pred_region
      _
    $region41: #{mbert_to_marian_forward.5} parent=1 // pred_fallthru
      _
    %333 = vsyncpa [#allocation6], 1

// kernel: mbert_to_marian_forward.3
$region0: #{mbert_to_marian_forward.3}
  #allocation0 [shape = 'u32[]', space=smem, size = 0x4, offset = 0x4, fixed_abs, tag = 'smem constant byte address 0x4 - core index']
  #allocation1 [shape = 'u32[144,128]{1,0:T(1,128)}', space=vmem, size = 0x12000, scoped, tag = 'internal scratch']
  %s0 = inlined_call_operand.vmem [shape: bf16[16,128], index: 0, kind: input, shape index: {}]
  %s1 = inlined_call_operand.vmem [shape: bf16[128,256], index: 1, kind: input, shape index: {}]
  %s2 = inlined_call_operand.vmem [shape: f32[1,256], index: 2, kind: input, shape index: {}]
  %s3 = inlined_call_operand.vmem [shape: bf16[256,128], index: 3, kind: input, shape index: {}]
  %s4 = inlined_call_operand.vmem [shape: f32[1,128], index: 4, kind: input, shape index: {}]
  %s5 = inlined_call_operand.vmem [shape: f32[1,128], index: 5, kind: input, shape index: {}]
  %s6 = inlined_call_operand.vmem [shape: f32[1,128], index: 6, kind: input, shape index: {}]
  %s7 = inlined_call_operand.vmem [shape: bf16[16,128], index: 7, kind: output, shape index: {}]
  %s8 = sld [smem:[#allocation0]]
  $region38: #{mbert_to_marian_forward.3} parent=0
    _
  %s10 = ssub.s32 1, %s8
  %s11 = scalar_select 0, %s10, %s8
  // Predicated region
  $region2: #{mbert_to_marian_forward.3} parent=0 // pred_check
    _
  $region3: #{mbert_to_marian_forward.3} parent=0 // pred_check_branch
    %13 = sbr.rel (0) target = $region5
  $region4: #{mbert_to_marian_forward.3} parent=0 // pred_region
    _
  $region5: #{mbert_to_marian_forward.3} parent=0 // pred_fallthru
    _
  // Predicated region
  $region6: #{mbert_to_marian_forward.3} parent=0 // pred_check
    _
  $region7: #{mbert_to_marian_forward.3} parent=0 // pred_check_branch
    %15 = sbr.rel (0) target = $region9
  $region8: #{mbert_to_marian_forward.3} parent=0 // pred_region
    _
  $region9: #{mbert_to_marian_forward.3} parent=0 // pred_fallthru
    _
  // Predicated region
  $region10: #{mbert_to_marian_forward.3} parent=0 // pred_check
    _
  $region11: #{mbert_to_marian_forward.3} parent=0 // pred_check_branch
    %17 = sbr.rel (0) target = $region13
  $region12: #{mbert_to_marian_forward.3} parent=0 // pred_region
    _
  $region13: #{mbert_to_marian_forward.3} parent=0 // pred_fallthru
    _
  // Predicated region
  $region14: #{mbert_to_marian_forward.3} parent=0 // pred_check
    _
  $region15: #{mbert_to_marian_forward.3} parent=0 // pred_check_branch
    %19 = sbr.rel (0) target = $region17
  $region16: #{mbert_to_marian_forward.3} parent=0 // pred_region
    _
  $region17: #{mbert_to_marian_forward.3} parent=0 // pred_fallthru
    _
  // Predicated region
  $region18: #{mbert_to_marian_forward.3} parent=0 // pred_check
    _
  $region19: #{mbert_to_marian_forward.3} parent=0 // pred_check_branch
    %21 = sbr.rel (0) target = $region21
  $region20: #{mbert_to_marian_forward.3} parent=0 // pred_region
    _
  $region21: #{mbert_to_marian_forward.3} parent=0 // pred_fallthru
    _
  // Predicated region
  $region22: #{mbert_to_marian_forward.3} parent=0 // pred_check
    _
  $region23: #{mbert_to_marian_forward.3} parent=0 // pred_check_branch
    %23 = sbr.rel (0) target = $region25
  $region24: #{mbert_to_marian_forward.3} parent=0 // pred_region
    _
  $region25: #{mbert_to_marian_forward.3} parent=0 // pred_fallthru
    _
  // Predicated region
  $region26: #{mbert_to_marian_forward.3} parent=0 // pred_check
    _
  $region27: #{mbert_to_marian_forward.3} parent=0 // pred_check_branch
    %25 = sbr.rel (0) target = $region29
  $region28: #{mbert_to_marian_forward.3} parent=0 // pred_region
    _
  $region29: #{mbert_to_marian_forward.3} parent=0 // pred_fallthru
    _
  %v27 = vld [vmem:[%s0] sm:$0xf]
  %v28 = vld [vmem:[%s0 + $0x4] sm:$0xf]
  %v29 = vld [vmem:[%s1] sm:$0xff]
  %v30 = vld [vmem:[%s1 + $0x8] sm:$0xff]
  %v31 = vld [vmem:[%s1 + $0x10] sm:$0xff]
  %v32 = vld [vmem:[%s1 + $0x18] sm:$0xff]
  %v33 = vld [vmem:[%s1 + $0x20] sm:$0xff]
  %v34 = vld [vmem:[%s1 + $0x28] sm:$0xff]
  %v35 = vld [vmem:[%s1 + $0x30] sm:$0xff]
  %v36 = vld [vmem:[%s1 + $0x38] sm:$0xff]
  %v37 = vld [vmem:[%s1 + $0x40] sm:$0xff]
  %v38 = vld [vmem:[%s1 + $0x48] sm:$0xff]
  %v39 = vld [vmem:[%s1 + $0x50] sm:$0xff]
  %v40 = vld [vmem:[%s1 + $0x58] sm:$0xff]
  %v41 = vld [vmem:[%s1 + $0x60] sm:$0xff]
  %v42 = vld [vmem:[%s1 + $0x68] sm:$0xff]
  %v43 = vld [vmem:[%s1 + $0x70] sm:$0xff]
  %v44 = vld [vmem:[%s1 + $0x78] sm:$0xff]
  %v45 = vld [vmem:[%s2] sm:$0x3]
  %v47 = vlaneseq
  %v48 = vshrl.u32 %v47, 7
  %v49 = vsub.s32 0, %v48
  %v50 = vrot.slane %v45, %v49
  %v51 = vlaneseq
  %v52 = vshrl.u32 %v51, 7
  %v53 = vsub.s32 1, %v52
  %v54 = vrot.slane %v45, %v53
  %v59 = vunpack.c.l.b16 %v27
  %v60 = vunpack.c.l.b16 %v28
  %v61 = vpack.c.b16 %v60, %v59
  %v79 = vunpack.c.l.b16 %v29
  %v80 = vunpack.c.h.b16 %v29
  %v81 = vunpack.c.l.b16 %v30
  %v82 = vunpack.c.h.b16 %v30
  %v83 = vunpack.c.l.b16 %v31
  %v84 = vunpack.c.h.b16 %v31
  %v85 = vunpack.c.l.b16 %v32
  %v86 = vunpack.c.h.b16 %v32
  %v87 = vunpack.c.l.b16 %v33
  %v88 = vunpack.c.h.b16 %v33
  %v89 = vunpack.c.l.b16 %v34
  %v90 = vunpack.c.h.b16 %v34
  %v91 = vunpack.c.l.b16 %v35
  %v92 = vunpack.c.h.b16 %v35
  %v93 = vunpack.c.l.b16 %v36
  %v94 = vunpack.c.h.b16 %v36
  %v95 = vunpack.c.l.b16 %v37
  %v96 = vunpack.c.h.b16 %v37
  %v97 = vunpack.c.l.b16 %v38
  %v98 = vunpack.c.h.b16 %v38
  %v99 = vunpack.c.l.b16 %v39
  %v100 = vunpack.c.h.b16 %v39
  %v101 = vunpack.c.l.b16 %v40
  %v102 = vunpack.c.h.b16 %v40
  %v103 = vunpack.c.l.b16 %v41
  %v104 = vunpack.c.h.b16 %v41
  %v105 = vunpack.c.l.b16 %v42
  %v106 = vunpack.c.h.b16 %v42
  %v107 = vunpack.c.l.b16 %v43
  %v108 = vunpack.c.h.b16 %v43
  %v109 = vunpack.c.l.b16 %v44
  %v110 = vunpack.c.h.b16 %v44
  %v111 = vpack.c.b16 %v81, %v79
  %v112 = vpack.c.b16 %v82, %v80
  %v113 = vpack.c.b16 %v85, %v83
  %v114 = vpack.c.b16 %v86, %v84
  %v115 = vpack.c.b16 %v89, %v87
  %v116 = vpack.c.b16 %v90, %v88
  %v117 = vpack.c.b16 %v93, %v91
  %v118 = vpack.c.b16 %v94, %v92
  %v119 = vpack.c.b16 %v97, %v95
  %v120 = vpack.c.b16 %v98, %v96
  %v121 = vpack.c.b16 %v101, %v99
  %v122 = vpack.c.b16 %v102, %v100
  %v123 = vpack.c.b16 %v105, %v103
  %v124 = vpack.c.b16 %v106, %v104
  %v125 = vpack.c.b16 %v109, %v107
  %v126 = vpack.c.b16 %v110, %v108
  %143 = vmatprep.subr.bf16.mxu0 %v112
  %144 = vmatpush1.bf16.msra.mxu0 %v111
  %145 = vmatprep.subr.bf16.mxu0 %v114
  %146 = vmatpush1.bf16.msra.mxu0 %v113
  %147 = vmatprep.subr.bf16.mxu0 %v116
  %148 = vmatpush1.bf16.msra.mxu0 %v115
  %149 = vmatprep.subr.bf16.mxu0 %v118
  %150 = vmatpush1.bf16.msra.mxu0 %v117
  %151 = vmatprep.subr.bf16.mxu0 %v120
  %152 = vmatpush1.bf16.msra.mxu0 %v119
  %153 = vmatprep.subr.bf16.mxu0 %v122
  %154 = vmatpush1.bf16.msra.mxu0 %v121
  %155 = vmatprep.subr.bf16.mxu0 %v124
  %156 = vmatpush1.bf16.msra.mxu0 %v123
  %157 = vmatprep.subr.bf16.mxu0 %v126
  %158 = vmatpush1.bf16.msra.mxu0 %v125
  %159 = vmatprep.subr.bf16.mxu0 0
  %160 = vmatpush1.bf16.msra.mxu0 0
  %161 = vmatprep.subr.bf16.mxu0 0
  %162 = vmatpush1.bf16.msra.mxu0 0
  %163 = vmatprep.subr.bf16.mxu0 0
  %164 = vmatpush1.bf16.msra.mxu0 0
  %165 = vmatprep.subr.bf16.mxu0 0
  %166 = vmatpush1.bf16.msra.mxu0 0
  %167 = vmatprep.subr.bf16.mxu0 0
  %168 = vmatpush1.bf16.msra.mxu0 0
  %169 = vmatprep.subr.bf16.mxu0 0
  %170 = vmatpush1.bf16.msra.mxu0 0
  %171 = vmatprep.subr.bf16.mxu0 0
  %172 = vmatpush1.bf16.msra.mxu0 0
  %173 = vmatprep.subr.bf16.mxu0 0
  %174 = vmatpush1.bf16.msra.mxu0 0
  %175 = vmatprep.mubr.bf16.mxu0 0
  %176 = vmatmul.mubr.bf16.gmra.mrb[0].mxu0 %v61
  %v177 = vpop.f32.mrb[0].mxu0
  %v178 = vadd.f32 %v50, %v177
  %v179 = vpop.f32.mrb[0].mxu0
  %v180 = vadd.f32 %v54, %v179
  %v181 = vpop.f32.mrb[0].mxu0
  %v182 = vadd.f32 %v50, %v181
  %v183 = vpop.f32.mrb[0].mxu0
  %v184 = vadd.f32 %v54, %v183
  %185 = vdwg.mxu0
  %v186 = vmul.f32 %v178, %v178
  %v187 = vmul.f32 %v180, %v180
  %v188 = vmul.f32 %v182, %v182
  %v189 = vmul.f32 %v184, %v184
  %v190 = vmul.f32 %v178, %v186
  %v191 = vmul.f32 %v180, %v187
  %v192 = vmul.f32 %v182, %v188
  %v193 = vmul.f32 %v184, %v189
  %v194 = vmul.f32 %v190, 0.044715
  %v195 = vmul.f32 %v191, 0.044715
  %v196 = vmul.f32 %v192, 0.044715
  %v197 = vmul.f32 %v193, 0.044715
  %v198 = vadd.f32 %v178, %v194
  %v199 = vadd.f32 %v180, %v195
  %v200 = vadd.f32 %v182, %v196
  %v201 = vadd.f32 %v184, %v197
  %v202 = vmul.f32 %v198, 0.7978846
  %v203 = vmul.f32 %v199, 0.7978846
  %v204 = vmul.f32 %v200, 0.7978846
  %v205 = vmul.f32 %v201, 0.7978846
  %v206 = vtanh.pop %v202
  %v207 = vtanh.pop %v203
  %v208 = vtanh.pop %v204
  %v209 = vtanh.pop %v205
  %v210 = vadd.f32 %v206, 1.0
  %v211 = vadd.f32 %v207, 1.0
  %v212 = vadd.f32 %v208, 1.0
  %v213 = vadd.f32 %v209, 1.0
  %v214 = vmul.f32 %v210, 0.5
  %v215 = vmul.f32 %v211, 0.5
  %v216 = vmul.f32 %v212, 0.5
  %v217 = vmul.f32 %v213, 0.5
  %v218 = vmul.f32 %v178, %v214
  %v219 = vmul.f32 %v180, %v215
  %v220 = vmul.f32 %v182, %v216
  %v221 = vmul.f32 %v184, %v217
  %v222 = vpack.c.bf16 %v220, %v218
  %v223 = vpack.c.bf16 %v221, %v219
  %v224 = vld [vmem:[%s3] sm:$0xf]
  %v225 = vld [vmem:[%s3 + $0x4] sm:$0xf]
  %v226 = vld [vmem:[%s3 + $0x8] sm:$0xf]
  %v227 = vld [vmem:[%s3 + $0xc] sm:$0xf]
  %v228 = vld [vmem:[%s3 + $0x10] sm:$0xf]
  %v229 = vld [vmem:[%s3 + $0x14] sm:$0xf]
  %v230 = vld [vmem:[%s3 + $0x18] sm:$0xf]
  %v231 = vld [vmem:[%s3 + $0x1c] sm:$0xf]
  %v232 = vld [vmem:[%s3 + $0x20] sm:$0xf]
  %v233 = vld [vmem:[%s3 + $0x24] sm:$0xf]
  %v234 = vld [vmem:[%s3 + $0x28] sm:$0xf]
  %v235 = vld [vmem:[%s3 + $0x2c] sm:$0xf]
  %v236 = vld [vmem:[%s3 + $0x30] sm:$0xf]
  %v237 = vld [vmem:[%s3 + $0x34] sm:$0xf]
  %v238 = vld [vmem:[%s3 + $0x38] sm:$0xf]
  %v239 = vld [vmem:[%s3 + $0x3c] sm:$0xf]
  %v240 = vld [vmem:[%s3 + $0x40] sm:$0xf]
  %v241 = vld [vmem:[%s3 + $0x44] sm:$0xf]
  %v242 = vld [vmem:[%s3 + $0x48] sm:$0xf]
  %v243 = vld [vmem:[%s3 + $0x4c] sm:$0xf]
  %v244 = vld [vmem:[%s3 + $0x50] sm:$0xf]
  %v245 = vld [vmem:[%s3 + $0x54] sm:$0xf]
  %v246 = vld [vmem:[%s3 + $0x58] sm:$0xf]
  %v247 = vld [vmem:[%s3 + $0x5c] sm:$0xf]
  %v248 = vld [vmem:[%s3 + $0x60] sm:$0xf]
  %v249 = vld [vmem:[%s3 + $0x64] sm:$0xf]
  %v250 = vld [vmem:[%s3 + $0x68] sm:$0xf]
  %v251 = vld [vmem:[%s3 + $0x6c] sm:$0xf]
  %v252 = vld [vmem:[%s3 + $0x70] sm:$0xf]
  %v253 = vld [vmem:[%s3 + $0x74] sm:$0xf]
  %v254 = vld [vmem:[%s3 + $0x78] sm:$0xf]
  %v255 = vld [vmem:[%s3 + $0x7c] sm:$0xf]
  %v256 = vld [vmem:[%s4] sm:$0x1]
  %v258 = vlaneseq
  %v259 = vshrl.u32 %v258, 7
  %v260 = vsub.s32 0, %v259
  %v261 = vrot.slane %v256, %v260
  %v295 = vunpack.c.l.b16 %v224
  %v296 = vunpack.c.l.b16 %v225
  %v297 = vunpack.c.l.b16 %v226
  %v298 = vunpack.c.l.b16 %v227
  %v299 = vunpack.c.l.b16 %v228
  %v300 = vunpack.c.l.b16 %v229
  %v301 = vunpack.c.l.b16 %v230
  %v302 = vunpack.c.l.b16 %v231
  %v303 = vunpack.c.l.b16 %v232
  %v304 = vunpack.c.l.b16 %v233
  %v305 = vunpack.c.l.b16 %v234
  %v306 = vunpack.c.l.b16 %v235
  %v307 = vunpack.c.l.b16 %v236
  %v308 = vunpack.c.l.b16 %v237
  %v309 = vunpack.c.l.b16 %v238
  %v310 = vunpack.c.l.b16 %v239
  %v311 = vunpack.c.l.b16 %v240
  %v312 = vunpack.c.l.b16 %v241
  %v313 = vunpack.c.l.b16 %v242
  %v314 = vunpack.c.l.b16 %v243
  %v315 = vunpack.c.l.b16 %v244
  %v316 = vunpack.c.l.b16 %v245
  %v317 = vunpack.c.l.b16 %v246
  %v318 = vunpack.c.l.b16 %v247
  %v319 = vunpack.c.l.b16 %v248
  %v320 = vunpack.c.l.b16 %v249
  %v321 = vunpack.c.l.b16 %v250
  %v322 = vunpack.c.l.b16 %v251
  %v323 = vunpack.c.l.b16 %v252
  %v324 = vunpack.c.l.b16 %v253
  %v325 = vunpack.c.l.b16 %v254
  %v326 = vunpack.c.l.b16 %v255
  %v327 = vpack.c.b16 %v296, %v295
  %v328 = vpack.c.b16 %v298, %v297
  %v329 = vpack.c.b16 %v300, %v299
  %v330 = vpack.c.b16 %v302, %v301
  %v331 = vpack.c.b16 %v304, %v303
  %v332 = vpack.c.b16 %v306, %v305
  %v333 = vpack.c.b16 %v308, %v307
  %v334 = vpack.c.b16 %v310, %v309
  %v335 = vpack.c.b16 %v312, %v311
  %v336 = vpack.c.b16 %v314, %v313
  %v337 = vpack.c.b16 %v316, %v315
  %v338 = vpack.c.b16 %v318, %v317
  %v339 = vpack.c.b16 %v320, %v319
  %v340 = vpack.c.b16 %v322, %v321
  %v341 = vpack.c.b16 %v324, %v323
  %v342 = vpack.c.b16 %v326, %v325
  %359 = vmatprep.subr.bf16.mxu0 0
  %360 = vmatpush1.bf16.msra.mxu0 %v327
  %361 = vmatprep.subr.bf16.mxu0 0
  %362 = vmatpush1.bf16.msra.mxu0 %v328
  %363 = vmatprep.subr.bf16.mxu0 0
  %364 = vmatpush1.bf16.msra.mxu0 %v329
  %365 = vmatprep.subr.bf16.mxu0 0
  %366 = vmatpush1.bf16.msra.mxu0 %v330
  %367 = vmatprep.subr.bf16.mxu0 0
  %368 = vmatpush1.bf16.msra.mxu0 %v331
  %369 = vmatprep.subr.bf16.mxu0 0
  %370 = vmatpush1.bf16.msra.mxu0 %v332
  %371 = vmatprep.subr.bf16.mxu0 0
  %372 = vmatpush1.bf16.msra.mxu0 %v333
  %373 = vmatprep.subr.bf16.mxu0 0
  %374 = vmatpush1.bf16.msra.mxu0 %v334
  %375 = vmatprep.subr.bf16.mxu0 0
  %376 = vmatpush1.bf16.msra.mxu0 %v335
  %377 = vmatprep.subr.bf16.mxu0 0
  %378 = vmatpush1.bf16.msra.mxu0 %v336
  %379 = vmatprep.subr.bf16.mxu0 0
  %380 = vmatpush1.bf16.msra.mxu0 %v337
  %381 = vmatprep.subr.bf16.mxu0 0
  %382 = vmatpush1.bf16.msra.mxu0 %v338
  %383 = vmatprep.subr.bf16.mxu0 0
  %384 = vmatpush1.bf16.msra.mxu0 %v339
  %385 = vmatprep.subr.bf16.mxu0 0
  %386 = vmatpush1.bf16.msra.mxu0 %v340
  %387 = vmatprep.subr.bf16.mxu0 0
  %388 = vmatpush1.bf16.msra.mxu0 %v341
  %389 = vmatprep.subr.bf16.mxu0 0
  %390 = vmatpush1.bf16.msra.mxu0 %v342
  %391 = vmatprep.mubr.bf16.mxu0 %v223
  %392 = vmatmul.mubr.bf16.gmra.mrb[0].mxu0 %v222
  %v393 = vpop.f32.mrb[0].mxu0
  %v394 = vadd.f32 %v261, %v393
  %v395 = vpop.f32.mrb[0].mxu0
  %v396 = vpop.f32.mrb[0].mxu0
  %v397 = vadd.f32 %v261, %v396
  %v398 = vpop.f32.mrb[0].mxu0
  %399 = vdwg.mxu0
  %v400 = vunpack.c.l.bf16 %v27
  %v401 = vunpack.c.l.bf16 %v28
  %v402 = vadd.f32 %v394, %v400
  %v403 = vadd.f32 %v397, %v401
  %404 = vadd.xlane.f32.xlu0 %v402
  %v405 = vpop.xlane.xlu0 %404
  %406 = vadd.xlane.f32.xlu0 %v403
  %v407 = vpop.xlane.xlu0 %406
  %v408 = vrcp.pop 128.0
  %v409 = vmul.f32 %v405, %v408
  %v410 = vmul.f32 %v407, %v408
  %v411 = vsub.f32 %v402, %v409
  %v412 = vsub.f32 %v403, %v410
  %v413 = vmul.f32 %v411, %v411
  %v414 = vmul.f32 %v412, %v412
  %415 = vadd.xlane.f32.xlu0 %v413
  %v416 = vpop.xlane.xlu0 %415
  %417 = vadd.xlane.f32.xlu0 %v414
  %v418 = vpop.xlane.xlu0 %417
  %v419 = vmul.f32 %v416, %v408
  %v420 = vmul.f32 %v418, %v408
  %v421 = vadd.f32 %v419, 1e-12
  %v422 = vadd.f32 %v420, 1e-12
  %v423 = vrsqrt.pop %v421
  %v424 = vrsqrt.pop %v422
  %v425 = vmul.f32 %v411, %v423
  %v426 = vmul.f32 %v412, %v424
  %v427 = vld [vmem:[%s5] sm:$0x1]
  %v429 = vlaneseq
  %v430 = vshrl.u32 %v429, 7
  %v431 = vsub.s32 0, %v430
  %v432 = vrot.slane %v427, %v431
  %v434 = vmul.f32 %v425, %v432
  %v435 = vmul.f32 %v426, %v432
  %v436 = vld [vmem:[%s6] sm:$0x1]
  %v438 = vlaneseq
  %v439 = vshrl.u32 %v438, 7
  %v440 = vsub.s32 0, %v439
  %v441 = vrot.slane %v436, %v440
  %v443 = vadd.f32 %v434, %v441
  %v444 = vadd.f32 %v435, %v441
  %v445 = vpack.c.bf16 %v444, %v443
  %v447 = vunpack.c.l.b16 %v445
  %v448 = vunpack.c.h.b16 %v445
  %v449 = vpack.c.b16 %v447, %v447
  %v450 = vpack.c.b16 %v448, %v448
  %453 = vst [vmem:[%s7] sm:$0xf] %v449
  %454 = vst [vmem:[%s7 + $0x4] sm:$0xf] %v450
  // Predicated region
  $region30: #{mbert_to_marian_forward.3} parent=0 // pred_check
    _
  $region31: #{mbert_to_marian_forward.3} parent=0 // pred_check_branch
    %456 = sbr.rel (0) target = $region33
  $region32: #{mbert_to_marian_forward.3} parent=0 // pred_region
    _
  $region33: #{mbert_to_marian_forward.3} parent=0 // pred_fallthru
    _
  // Predicated region
  $region34: #{mbert_to_marian_forward.3} parent=0 // pred_check
    _
  $region35: #{mbert_to_marian_forward.3} parent=0 // pred_check_branch
    %458 = sbr.rel (0) target = $region37
  $region36: #{mbert_to_marian_forward.3} parent=0 // pred_region
    _
  $region37: #{mbert_to_marian_forward.3} parent=0 // pred_fallthru
    _

// kernel: mbert_to_marian_forward.4
$region0: #{mbert_to_marian_forward.4}
  #allocation0 [shape = 'u32[]', space=smem, size = 0x4, offset = 0x4, fixed_abs, tag = 'smem constant byte address 0x4 - core index']
  #allocation1 [shape = 'u32[144,128]{1,0:T(1,128)}', space=vmem, size = 0x12000, scoped, tag = 'internal scratch']
  %s0 = inlined_call_operand.vmem [shape: bf16[16,128], index: 0, kind: input, shape index: {}]
  %s1 = inlined_call_operand.vmem [shape: bf16[16,128], index: 1, kind: input, shape index: {}]
  %s2 = inlined_call_operand.vmem [shape: f32[2,1,8], index: 2, kind: input, shape index: {}]
  %s3 = inlined_call_operand.vmem [shape: bf16[128,128], index: 3, kind: input, shape index: {}]
  %s4 = inlined_call_operand.vmem [shape: f32[1,128], index: 4, kind: input, shape index: {}]
  %s5 = inlined_call_operand.vmem [shape: bf16[128,256], index: 5, kind: input, shape index: {}]
  %s6 = inlined_call_operand.vmem [shape: f32[1,256], index: 6, kind: input, shape index: {}]
  %s7 = inlined_call_operand.vmem [shape: bf16[128,128], index: 7, kind: input, shape index: {}]
  %s8 = inlined_call_operand.vmem [shape: f32[1,128], index: 8, kind: input, shape index: {}]
  %s9 = inlined_call_operand.vmem [shape: bf16[16,128], index: 9, kind: output, shape index: {}]
  %s10 = sld [smem:[#allocation0]]
  $region46: #{mbert_to_marian_forward.4} parent=0
    _
  %s12 = ssub.s32 1, %s10
  %s13 = scalar_select 0, %s12, %s10
  // Predicated region
  $region2: #{mbert_to_marian_forward.4} parent=0 // pred_check
    _
  $region3: #{mbert_to_marian_forward.4} parent=0 // pred_check_branch
    %15 = sbr.rel (0) target = $region5
  $region4: #{mbert_to_marian_forward.4} parent=0 // pred_region
    _
  $region5: #{mbert_to_marian_forward.4} parent=0 // pred_fallthru
    _
  // Predicated region
  $region6: #{mbert_to_marian_forward.4} parent=0 // pred_check
    _
  $region7: #{mbert_to_marian_forward.4} parent=0 // pred_check_branch
    %17 = sbr.rel (0) target = $region9
  $region8: #{mbert_to_marian_forward.4} parent=0 // pred_region
    _
  $region9: #{mbert_to_marian_forward.4} parent=0 // pred_fallthru
    _
  // Predicated region
  $region10: #{mbert_to_marian_forward.4} parent=0 // pred_check
    _
  $region11: #{mbert_to_marian_forward.4} parent=0 // pred_check_branch
    %19 = sbr.rel (0) target = $region13
  $region12: #{mbert_to_marian_forward.4} parent=0 // pred_region
    _
  $region13: #{mbert_to_marian_forward.4} parent=0 // pred_fallthru
    _
  // Predicated region
  $region14: #{mbert_to_marian_forward.4} parent=0 // pred_check
    _
  $region15: #{mbert_to_marian_forward.4} parent=0 // pred_check_branch
    %21 = sbr.rel (0) target = $region17
  $region16: #{mbert_to_marian_forward.4} parent=0 // pred_region
    _
  $region17: #{mbert_to_marian_forward.4} parent=0 // pred_fallthru
    _
  // Predicated region
  $region18: #{mbert_to_marian_forward.4} parent=0 // pred_check
    _
  $region19: #{mbert_to_marian_forward.4} parent=0 // pred_check_branch
    %23 = sbr.rel (0) target = $region21
  $region20: #{mbert_to_marian_forward.4} parent=0 // pred_region
    _
  $region21: #{mbert_to_marian_forward.4} parent=0 // pred_fallthru
    _
  // Predicated region
  $region22: #{mbert_to_marian_forward.4} parent=0 // pred_check
    _
  $region23: #{mbert_to_marian_forward.4} parent=0 // pred_check_branch
    %25 = sbr.rel (0) target = $region25
  $region24: #{mbert_to_marian_forward.4} parent=0 // pred_region
    _
  $region25: #{mbert_to_marian_forward.4} parent=0 // pred_fallthru
    _
  // Predicated region
  $region26: #{mbert_to_marian_forward.4} parent=0 // pred_check
    _
  $region27: #{mbert_to_marian_forward.4} parent=0 // pred_check_branch
    %27 = sbr.rel (0) target = $region29
  $region28: #{mbert_to_marian_forward.4} parent=0 // pred_region
    _
  $region29: #{mbert_to_marian_forward.4} parent=0 // pred_fallthru
    _
  // Predicated region
  $region30: #{mbert_to_marian_forward.4} parent=0 // pred_check
    _
  $region31: #{mbert_to_marian_forward.4} parent=0 // pred_check_branch
    %29 = sbr.rel (0) target = $region33
  $region32: #{mbert_to_marian_forward.4} parent=0 // pred_region
    _
  $region33: #{mbert_to_marian_forward.4} parent=0 // pred_fallthru
    _
  // Predicated region
  $region34: #{mbert_to_marian_forward.4} parent=0 // pred_check
    _
  $region35: #{mbert_to_marian_forward.4} parent=0 // pred_check_branch
    %31 = sbr.rel (0) target = $region37
  $region36: #{mbert_to_marian_forward.4} parent=0 // pred_region
    _
  $region37: #{mbert_to_marian_forward.4} parent=0 // pred_fallthru
    _
  %v33 = vld [vmem:[%s0] sm:$0xf]
  %v34 = vld [vmem:[%s0 + $0x4] sm:$0xf]
  %v35 = vld [vmem:[%s3] sm:$0xf]
  %v36 = vld [vmem:[%s3 + $0x4] sm:$0xf]
  %v37 = vld [vmem:[%s3 + $0x8] sm:$0xf]
  %v38 = vld [vmem:[%s3 + $0xc] sm:$0xf]
  %v39 = vld [vmem:[%s3 + $0x10] sm:$0xf]
  %v40 = vld [vmem:[%s3 + $0x14] sm:$0xf]
  %v41 = vld [vmem:[%s3 + $0x18] sm:$0xf]
  %v42 = vld [vmem:[%s3 + $0x1c] sm:$0xf]
  %v43 = vld [vmem:[%s3 + $0x20] sm:$0xf]
  %v44 = vld [vmem:[%s3 + $0x24] sm:$0xf]
  %v45 = vld [vmem:[%s3 + $0x28] sm:$0xf]
  %v46 = vld [vmem:[%s3 + $0x2c] sm:$0xf]
  %v47 = vld [vmem:[%s3 + $0x30] sm:$0xf]
  %v48 = vld [vmem:[%s3 + $0x34] sm:$0xf]
  %v49 = vld [vmem:[%s3 + $0x38] sm:$0xf]
  %v50 = vld [vmem:[%s3 + $0x3c] sm:$0xf]
  %v51 = vld [vmem:[%s4] sm:$0x1]
  %v53 = vlaneseq
  %v54 = vshrl.u32 %v53, 7
  %v55 = vsub.s32 0, %v54
  %v56 = vrot.slane %v51, %v55
  %v60 = vunpack.c.l.b16 %v33
  %v61 = vunpack.c.l.b16 %v34
  %v62 = vpack.c.b16 %v61, %v60
  %v80 = vunpack.c.l.b16 %v35
  %v81 = vunpack.c.l.b16 %v36
  %v82 = vunpack.c.l.b16 %v37
  %v83 = vunpack.c.l.b16 %v38
  %v84 = vunpack.c.l.b16 %v39
  %v85 = vunpack.c.l.b16 %v40
  %v86 = vunpack.c.l.b16 %v41
  %v87 = vunpack.c.l.b16 %v42
  %v88 = vunpack.c.l.b16 %v43
  %v89 = vunpack.c.l.b16 %v44
  %v90 = vunpack.c.l.b16 %v45
  %v91 = vunpack.c.l.b16 %v46
  %v92 = vunpack.c.l.b16 %v47
  %v93 = vunpack.c.l.b16 %v48
  %v94 = vunpack.c.l.b16 %v49
  %v95 = vunpack.c.l.b16 %v50
  %v96 = vpack.c.b16 %v81, %v80
  %v97 = vpack.c.b16 %v83, %v82
  %v98 = vpack.c.b16 %v85, %v84
  %v99 = vpack.c.b16 %v87, %v86
  %v100 = vpack.c.b16 %v89, %v88
  %v101 = vpack.c.b16 %v91, %v90
  %v102 = vpack.c.b16 %v93, %v92
  %v103 = vpack.c.b16 %v95, %v94
  %112 = vmatprep.subr.bf16.mxu0 0
  %113 = vmatpush1.bf16.msra.mxu0 %v96
  %114 = vmatprep.subr.bf16.mxu0 0
  %115 = vmatpush1.bf16.msra.mxu0 %v97
  %116 = vmatprep.subr.bf16.mxu0 0
  %117 = vmatpush1.bf16.msra.mxu0 %v98
  %118 = vmatprep.subr.bf16.mxu0 0
  %119 = vmatpush1.bf16.msra.mxu0 %v99
  %120 = vmatprep.subr.bf16.mxu0 0
  %121 = vmatpush1.bf16.msra.mxu0 %v100
  %122 = vmatprep.subr.bf16.mxu0 0
  %123 = vmatpush1.bf16.msra.mxu0 %v101
  %124 = vmatprep.subr.bf16.mxu0 0
  %125 = vmatpush1.bf16.msra.mxu0 %v102
  %126 = vmatprep.subr.bf16.mxu0 0
  %127 = vmatpush1.bf16.msra.mxu0 %v103
  %128 = vmatprep.subr.bf16.mxu0 0
  %129 = vmatpush1.bf16.msra.mxu0 0
  %130 = vmatprep.subr.bf16.mxu0 0
  %131 = vmatpush1.bf16.msra.mxu0 0
  %132 = vmatprep.subr.bf16.mxu0 0
  %133 = vmatpush1.bf16.msra.mxu0 0
  %134 = vmatprep.subr.bf16.mxu0 0
  %135 = vmatpush1.bf16.msra.mxu0 0
  %136 = vmatprep.subr.bf16.mxu0 0
  %137 = vmatpush1.bf16.msra.mxu0 0
  %138 = vmatprep.subr.bf16.mxu0 0
  %139 = vmatpush1.bf16.msra.mxu0 0
  %140 = vmatprep.subr.bf16.mxu0 0
  %141 = vmatpush1.bf16.msra.mxu0 0
  %142 = vmatprep.subr.bf16.mxu0 0
  %143 = vmatpush1.bf16.msra.mxu0 0
  %144 = vmatprep.mubr.bf16.mxu0 0
  %145 = vmatmul.mubr.bf16.gmra.mrb[0].mxu0 %v62
  %v146 = vpop.f32.mrb[0].mxu0
  %v147 = vadd.f32 %v56, %v146
  %v148 = vpop.f32.mrb[0].mxu0
  %v149 = vpop.f32.mrb[0].mxu0
  %v150 = vadd.f32 %v56, %v149
  %v151 = vpop.f32.mrb[0].mxu0
  %152 = vdwg.mxu0
  %v153 = vld [vmem:[%s1] sm:$0xf]
  %v154 = vld [vmem:[%s1 + $0x4] sm:$0xf]
  %v155 = vld [vmem:[%s5] sm:$0xff]
  %v156 = vld [vmem:[%s5 + $0x8] sm:$0xff]
  %v157 = vld [vmem:[%s5 + $0x10] sm:$0xff]
  %v158 = vld [vmem:[%s5 + $0x18] sm:$0xff]
  %v159 = vld [vmem:[%s5 + $0x20] sm:$0xff]
  %v160 = vld [vmem:[%s5 + $0x28] sm:$0xff]
  %v161 = vld [vmem:[%s5 + $0x30] sm:$0xff]
  %v162 = vld [vmem:[%s5 + $0x38] sm:$0xff]
  %v163 = vld [vmem:[%s5 + $0x40] sm:$0xff]
  %v164 = vld [vmem:[%s5 + $0x48] sm:$0xff]
  %v165 = vld [vmem:[%s5 + $0x50] sm:$0xff]
  %v166 = vld [vmem:[%s5 + $0x58] sm:$0xff]
  %v167 = vld [vmem:[%s5 + $0x60] sm:$0xff]
  %v168 = vld [vmem:[%s5 + $0x68] sm:$0xff]
  %v169 = vld [vmem:[%s5 + $0x70] sm:$0xff]
  %v170 = vld [vmem:[%s5 + $0x78] sm:$0xff]
  %v171 = vld [vmem:[%s6] sm:$0x3]
  %v173 = vlaneseq
  %v174 = vshrl.u32 %v173, 7
  %v175 = vsub.s32 0, %v174
  %v176 = vrot.slane %v171, %v175
  %v177 = vlaneseq
  %v178 = vshrl.u32 %v177, 7
  %v179 = vsub.s32 1, %v178
  %v180 = vrot.slane %v171, %v179
  %v185 = vunpack.c.l.b16 %v153
  %v186 = vunpack.c.l.b16 %v154
  %v187 = vpack.c.b16 %v186, %v185
  %v205 = vunpack.c.l.b16 %v155
  %v206 = vunpack.c.h.b16 %v155
  %v207 = vunpack.c.l.b16 %v156
  %v208 = vunpack.c.h.b16 %v156
  %v209 = vunpack.c.l.b16 %v157
  %v210 = vunpack.c.h.b16 %v157
  %v211 = vunpack.c.l.b16 %v158
  %v212 = vunpack.c.h.b16 %v158
  %v213 = vunpack.c.l.b16 %v159
  %v214 = vunpack.c.h.b16 %v159
  %v215 = vunpack.c.l.b16 %v160
  %v216 = vunpack.c.h.b16 %v160
  %v217 = vunpack.c.l.b16 %v161
  %v218 = vunpack.c.h.b16 %v161
  %v219 = vunpack.c.l.b16 %v162
  %v220 = vunpack.c.h.b16 %v162
  %v221 = vunpack.c.l.b16 %v163
  %v222 = vunpack.c.h.b16 %v163
  %v223 = vunpack.c.l.b16 %v164
  %v224 = vunpack.c.h.b16 %v164
  %v225 = vunpack.c.l.b16 %v165
  %v226 = vunpack.c.h.b16 %v165
  %v227 = vunpack.c.l.b16 %v166
  %v228 = vunpack.c.h.b16 %v166
  %v229 = vunpack.c.l.b16 %v167
  %v230 = vunpack.c.h.b16 %v167
  %v231 = vunpack.c.l.b16 %v168
  %v232 = vunpack.c.h.b16 %v168
  %v233 = vunpack.c.l.b16 %v169
  %v234 = vunpack.c.h.b16 %v169
  %v235 = vunpack.c.l.b16 %v170
  %v236 = vunpack.c.h.b16 %v170
  %v237 = vpack.c.b16 %v207, %v205
  %v238 = vpack.c.b16 %v208, %v206
  %v239 = vpack.c.b16 %v211, %v209
  %v240 = vpack.c.b16 %v212, %v210
  %v241 = vpack.c.b16 %v215, %v213
  %v242 = vpack.c.b16 %v216, %v214
  %v243 = vpack.c.b16 %v219, %v217
  %v244 = vpack.c.b16 %v220, %v218
  %v245 = vpack.c.b16 %v223, %v221
  %v246 = vpack.c.b16 %v224, %v222
  %v247 = vpack.c.b16 %v227, %v225
  %v248 = vpack.c.b16 %v228, %v226
  %v249 = vpack.c.b16 %v231, %v229
  %v250 = vpack.c.b16 %v232, %v230
  %v251 = vpack.c.b16 %v235, %v233
  %v252 = vpack.c.b16 %v236, %v234
  %269 = vmatprep.subr.bf16.mxu0 %v238
  %270 = vmatpush1.bf16.msra.mxu0 %v237
  %271 = vmatprep.subr.bf16.mxu0 %v240
  %272 = vmatpush1.bf16.msra.mxu0 %v239
  %273 = vmatprep.subr.bf16.mxu0 %v242
  %274 = vmatpush1.bf16.msra.mxu0 %v241
  %275 = vmatprep.subr.bf16.mxu0 %v244
  %276 = vmatpush1.bf16.msra.mxu0 %v243
  %277 = vmatprep.subr.bf16.mxu0 %v246
  %278 = vmatpush1.bf16.msra.mxu0 %v245
  %279 = vmatprep.subr.bf16.mxu0 %v248
  %280 = vmatpush1.bf16.msra.mxu0 %v247
  %281 = vmatprep.subr.bf16.mxu0 %v250
  %282 = vmatpush1.bf16.msra.mxu0 %v249
  %283 = vmatprep.subr.bf16.mxu0 %v252
  %284 = vmatpush1.bf16.msra.mxu0 %v251
  %285 = vmatprep.subr.bf16.mxu0 0
  %286 = vmatpush1.bf16.msra.mxu0 0
  %287 = vmatprep.subr.bf16.mxu0 0
  %288 = vmatpush1.bf16.msra.mxu0 0
  %289 = vmatprep.subr.bf16.mxu0 0
  %290 = vmatpush1.bf16.msra.mxu0 0
  %291 = vmatprep.subr.bf16.mxu0 0
  %292 = vmatpush1.bf16.msra.mxu0 0
  %293 = vmatprep.subr.bf16.mxu0 0
  %294 = vmatpush1.bf16.msra.mxu0 0
  %295 = vmatprep.subr.bf16.mxu0 0
  %296 = vmatpush1.bf16.msra.mxu0 0
  %297 = vmatprep.subr.bf16.mxu0 0
  %298 = vmatpush1.bf16.msra.mxu0 0
  %299 = vmatprep.subr.bf16.mxu0 0
  %300 = vmatpush1.bf16.msra.mxu0 0
  %301 = vmatprep.mubr.bf16.mxu0 0
  %302 = vmatmul.mubr.bf16.gmra.mrb[0].mxu0 %v187
  %v303 = vpop.f32.mrb[0].mxu0
  %v304 = vadd.f32 %v176, %v303
  %v305 = vpop.f32.mrb[0].mxu0
  %v306 = vadd.f32 %v180, %v305
  %v307 = vpop.f32.mrb[0].mxu0
  %v308 = vadd.f32 %v176, %v307
  %v309 = vpop.f32.mrb[0].mxu0
  %v310 = vadd.f32 %v180, %v309
  %311 = vdwg.mxu0
  %v312 = vpack.c.bf16 %v147, %v147
  %v313 = vpack.c.bf16 %v150, %v150
  %v314 = vpack.c.bf16 %v304, %v304
  %v315 = vpack.c.bf16 %v308, %v308
  %v316 = vpack.c.bf16 %v306, %v306
  %v317 = vpack.c.bf16 %v310, %v310
  %318 = vmatprep.subr.bf16.mxu0 0
  %319 = vmatpush1.bf16.xpose.msra.mxu0 %v314
  %320 = vmatprep.subr.bf16.mxu0 0
  %321 = vmatpush1.bf16.xpose.msra.mxu0 0
  %322 = vmatprep.subr.bf16.mxu0 0
  %323 = vmatpush1.bf16.xpose.msra.mxu0 0
  %324 = vmatprep.subr.bf16.mxu0 0
  %325 = vmatpush1.bf16.xpose.msra.mxu0 0
  %326 = vmatprep.subr.bf16.mxu0 0
  %327 = vmatpush1.bf16.xpose.msra.mxu0 0
  %328 = vmatprep.subr.bf16.mxu0 0
  %329 = vmatpush1.bf16.xpose.msra.mxu0 0
  %330 = vmatprep.subr.bf16.mxu0 0
  %331 = vmatpush1.bf16.xpose.msra.mxu0 0
  %332 = vmatprep.subr.bf16.mxu0 0
  %333 = vmatpush1.bf16.xpose.msra.mxu0 0
  %334 = vmatprep.subr.bf16.mxu0 0
  %335 = vmatpush1.bf16.xpose.msra.mxu0 0
  %336 = vmatprep.subr.bf16.mxu0 0
  %337 = vmatpush1.bf16.xpose.msra.mxu0 0
  %338 = vmatprep.subr.bf16.mxu0 0
  %339 = vmatpush1.bf16.xpose.msra.mxu0 0
  %340 = vmatprep.subr.bf16.mxu0 0
  %341 = vmatpush1.bf16.xpose.msra.mxu0 0
  %342 = vmatprep.subr.bf16.mxu0 0
  %343 = vmatpush1.bf16.xpose.msra.mxu0 0
  %344 = vmatprep.subr.bf16.mxu0 0
  %345 = vmatpush1.bf16.xpose.msra.mxu0 0
  %346 = vmatprep.subr.bf16.mxu0 0
  %347 = vmatpush1.bf16.xpose.msra.mxu0 0
  %348 = vmatprep.subr.bf16.mxu0 0
  %349 = vmatpush1.bf16.xpose.msra.mxu0 0
  %350 = vmatprep.mubr.bf16.mxu0 0
  %351 = vmatmul.mubr.bf16.gmra.mrb[0].mxu0 %v312
  %v352 = vpop.f32.mrb[0].mxu0
  %v353 = vadd.f32 0.0, %v352
  %v354 = vpop.f32.mrb[0].mxu0
  %v355 = vpop.f32.mrb[0].mxu0
  %v356 = vpop.f32.mrb[0].mxu0
  %357 = vdwg.mxu0
  %358 = vmatprep.subr.bf16.mxu0 0
  %359 = vmatpush1.bf16.xpose.msra.mxu0 %v315
  %360 = vmatprep.subr.bf16.mxu0 0
  %361 = vmatpush1.bf16.xpose.msra.mxu0 0
  %362 = vmatprep.subr.bf16.mxu0 0
  %363 = vmatpush1.bf16.xpose.msra.mxu0 0
  %364 = vmatprep.subr.bf16.mxu0 0
  %365 = vmatpush1.bf16.xpose.msra.mxu0 0
  %366 = vmatprep.subr.bf16.mxu0 0
  %367 = vmatpush1.bf16.xpose.msra.mxu0 0
  %368 = vmatprep.subr.bf16.mxu0 0
  %369 = vmatpush1.bf16.xpose.msra.mxu0 0
  %370 = vmatprep.subr.bf16.mxu0 0
  %371 = vmatpush1.bf16.xpose.msra.mxu0 0
  %372 = vmatprep.subr.bf16.mxu0 0
  %373 = vmatpush1.bf16.xpose.msra.mxu0 0
  %374 = vmatprep.subr.bf16.mxu0 0
  %375 = vmatpush1.bf16.xpose.msra.mxu0 0
  %376 = vmatprep.subr.bf16.mxu0 0
  %377 = vmatpush1.bf16.xpose.msra.mxu0 0
  %378 = vmatprep.subr.bf16.mxu0 0
  %379 = vmatpush1.bf16.xpose.msra.mxu0 0
  %380 = vmatprep.subr.bf16.mxu0 0
  %381 = vmatpush1.bf16.xpose.msra.mxu0 0
  %382 = vmatprep.subr.bf16.mxu0 0
  %383 = vmatpush1.bf16.xpose.msra.mxu0 0
  %384 = vmatprep.subr.bf16.mxu0 0
  %385 = vmatpush1.bf16.xpose.msra.mxu0 0
  %386 = vmatprep.subr.bf16.mxu0 0
  %387 = vmatpush1.bf16.xpose.msra.mxu0 0
  %388 = vmatprep.subr.bf16.mxu0 0
  %389 = vmatpush1.bf16.xpose.msra.mxu0 0
  %390 = vmatprep.mubr.bf16.mxu0 0
  %391 = vmatmul.mubr.bf16.gmra.mrb[0].mxu0 %v313
  %v392 = vpop.f32.mrb[0].mxu0
  %v393 = vadd.f32 0.0, %v392
  %v394 = vpop.f32.mrb[0].mxu0
  %v395 = vpop.f32.mrb[0].mxu0
  %v396 = vpop.f32.mrb[0].mxu0
  %397 = vdwg.mxu0
  %v398 = vmul.f32 %v353, 0.088388346
  %v399 = vmul.f32 %v393, 0.088388346
  %v400 = vld [vmem:[%s2] sm:$0x1]
  %v401 = vld [vmem:[%s2 + $0x1] sm:$0x1]
  %v404 = vlaneseq
  %v405 = vshrl.u32 %v404, 7
  %v406 = vsub.s32 0, %v405
  %v407 = vrot.slane %v400, %v406
  %v408 = vlaneseq
  %v409 = vshrl.u32 %v408, 7
  %v410 = vsub.s32 0, %v409
  %v411 = vrot.slane %v401, %v410
  %v414 = vadd.f32 %v398, %v407
  %v415 = vadd.f32 %v399, %v411
  %vm416 = vcmask 64512
  %v417 = vsel %vm416, %v414, -inf
  %418 = vmax.xlane.f32.xlu0 %v417
  %v419 = vpop.xlane.xlu0 %418
  %v420 = vsel %vm416, %v415, -inf
  %421 = vmax.xlane.f32.xlu0 %v420
  %v422 = vpop.xlane.xlu0 %421
  %v423 = vsub.f32 %v414, %v419
  %v424 = vsub.f32 %v415, %v422
  %v425 = vmul.f32 %v423, 1.442695
  %v426 = vpow.pop %v425
  %v427 = vmul.f32 %v424, 1.442695
  %v428 = vpow.pop %v427
  %v429 = vsel %vm416, %v426, 0.0
  %430 = vadd.xlane.f32.xlu0 %v429
  %v431 = vpop.xlane.xlu0 %430
  %v432 = vsel %vm416, %v428, 0.0
  %433 = vadd.xlane.f32.xlu0 %v432
  %v434 = vpop.xlane.xlu0 %433
  %v435 = vrcp.pop %v431
  %v436 = vrcp.pop %v434
  %v437 = vmul.f32 %v426, %v435
  %v438 = vmul.f32 %v428, %v436
  %v439 = vpack.c.bf16 %v437, %v437
  %v440 = vpack.c.bf16 %v438, %v438
  %v442 = vsel %vm416, %v439, 0
  %vm444 = vcmask 1043456
  %v446 = vsel %vm444, %v316, 0
  %448 = vmatprep.subr.bf16.mxu0 0
  %449 = vmatpush1.bf16.msra.mxu0 %v446
  %450 = vmatprep.subr.bf16.mxu0 0
  %451 = vmatpush1.bf16.msra.mxu0 0
  %452 = vmatprep.subr.bf16.mxu0 0
  %453 = vmatpush1.bf16.msra.mxu0 0
  %454 = vmatprep.subr.bf16.mxu0 0
  %455 = vmatpush1.bf16.msra.mxu0 0
  %456 = vmatprep.subr.bf16.mxu0 0
  %457 = vmatpush1.bf16.msra.mxu0 0
  %458 = vmatprep.subr.bf16.mxu0 0
  %459 = vmatpush1.bf16.msra.mxu0 0
  %460 = vmatprep.subr.bf16.mxu0 0
  %461 = vmatpush1.bf16.msra.mxu0 0
  %462 = vmatprep.subr.bf16.mxu0 0
  %463 = vmatpush1.bf16.msra.mxu0 0
  %464 = vmatprep.subr.bf16.mxu0 0
  %465 = vmatpush1.bf16.msra.mxu0 0
  %466 = vmatprep.subr.bf16.mxu0 0
  %467 = vmatpush1.bf16.msra.mxu0 0
  %468 = vmatprep.subr.bf16.mxu0 0
  %469 = vmatpush1.bf16.msra.mxu0 0
  %470 = vmatprep.subr.bf16.mxu0 0
  %471 = vmatpush1.bf16.msra.mxu0 0
  %472 = vmatprep.subr.bf16.mxu0 0
  %473 = vmatpush1.bf16.msra.mxu0 0
  %474 = vmatprep.subr.bf16.mxu0 0
  %475 = vmatpush1.bf16.msra.mxu0 0
  %476 = vmatprep.subr.bf16.mxu0 0
  %477 = vmatpush1.bf16.msra.mxu0 0
  %478 = vmatprep.subr.bf16.mxu0 0
  %479 = vmatpush1.bf16.msra.mxu0 0
  %480 = vmatprep.mubr.bf16.mxu0 0
  %481 = vmatmul.mubr.bf16.gmra.mrb[0].mxu0 %v442
  %v482 = vpop.f32.mrb[0].mxu0
  %v483 = vadd.f32 0.0, %v482
  %v484 = vpop.f32.mrb[0].mxu0
  %v485 = vpop.f32.mrb[0].mxu0
  %v486 = vpop.f32.mrb[0].mxu0
  %487 = vdwg.mxu0
  %v489 = vsel %vm416, %v440, 0
  %v492 = vsel %vm444, %v317, 0
  %494 = vmatprep.subr.bf16.mxu0 0
  %495 = vmatpush1.bf16.msra.mxu0 %v492
  %496 = vmatprep.subr.bf16.mxu0 0
  %497 = vmatpush1.bf16.msra.mxu0 0
  %498 = vmatprep.subr.bf16.mxu0 0
  %499 = vmatpush1.bf16.msra.mxu0 0
  %500 = vmatprep.subr.bf16.mxu0 0
  %501 = vmatpush1.bf16.msra.mxu0 0
  %502 = vmatprep.subr.bf16.mxu0 0
  %503 = vmatpush1.bf16.msra.mxu0 0
  %504 = vmatprep.subr.bf16.mxu0 0
  %505 = vmatpush1.bf16.msra.mxu0 0
  %506 = vmatprep.subr.bf16.mxu0 0
  %507 = vmatpush1.bf16.msra.mxu0 0
  %508 = vmatprep.subr.bf16.mxu0 0
  %509 = vmatpush1.bf16.msra.mxu0 0
  %510 = vmatprep.subr.bf16.mxu0 0
  %511 = vmatpush1.bf16.msra.mxu0 0
  %512 = vmatprep.subr.bf16.mxu0 0
  %513 = vmatpush1.bf16.msra.mxu0 0
  %514 = vmatprep.subr.bf16.mxu0 0
  %515 = vmatpush1.bf16.msra.mxu0 0
  %516 = vmatprep.subr.bf16.mxu0 0
  %517 = vmatpush1.bf16.msra.mxu0 0
  %518 = vmatprep.subr.bf16.mxu0 0
  %519 = vmatpush1.bf16.msra.mxu0 0
  %520 = vmatprep.subr.bf16.mxu0 0
  %521 = vmatpush1.bf16.msra.mxu0 0
  %522 = vmatprep.subr.bf16.mxu0 0
  %523 = vmatpush1.bf16.msra.mxu0 0
  %524 = vmatprep.subr.bf16.mxu0 0
  %525 = vmatpush1.bf16.msra.mxu0 0
  %526 = vmatprep.mubr.bf16.mxu0 0
  %527 = vmatmul.mubr.bf16.gmra.mrb[0].mxu0 %v489
  %v528 = vpop.f32.mrb[0].mxu0
  %v529 = vadd.f32 0.0, %v528
  %v530 = vpop.f32.mrb[0].mxu0
  %v531 = vpop.f32.mrb[0].mxu0
  %v532 = vpop.f32.mrb[0].mxu0
  %533 = vdwg.mxu0
  %v534 = vpack.c.bf16 %v529, %v483
  %v535 = vld [vmem:[%s7] sm:$0xf]
  %v536 = vld [vmem:[%s7 + $0x4] sm:$0xf]
  %v537 = vld [vmem:[%s7 + $0x8] sm:$0xf]
  %v538 = vld [vmem:[%s7 + $0xc] sm:$0xf]
  %v539 = vld [vmem:[%s7 + $0x10] sm:$0xf]
  %v540 = vld [vmem:[%s7 + $0x14] sm:$0xf]
  %v541 = vld [vmem:[%s7 + $0x18] sm:$0xf]
  %v542 = vld [vmem:[%s7 + $0x1c] sm:$0xf]
  %v543 = vld [vmem:[%s7 + $0x20] sm:$0xf]
  %v544 = vld [vmem:[%s7 + $0x24] sm:$0xf]
  %v545 = vld [vmem:[%s7 + $0x28] sm:$0xf]
  %v546 = vld [vmem:[%s7 + $0x2c] sm:$0xf]
  %v547 = vld [vmem:[%s7 + $0x30] sm:$0xf]
  %v548 = vld [vmem:[%s7 + $0x34] sm:$0xf]
  %v549 = vld [vmem:[%s7 + $0x38] sm:$0xf]
  %v550 = vld [vmem:[%s7 + $0x3c] sm:$0xf]
  %v551 = vld [vmem:[%s8] sm:$0x1]
  %v553 = vlaneseq
  %v554 = vshrl.u32 %v553, 7
  %v555 = vsub.s32 0, %v554
  %v556 = vrot.slane %v551, %v555
  %v574 = vunpack.c.l.b16 %v535
  %v575 = vunpack.c.l.b16 %v536
  %v576 = vunpack.c.l.b16 %v537
  %v577 = vunpack.c.l.b16 %v538
  %v578 = vunpack.c.l.b16 %v539
  %v579 = vunpack.c.l.b16 %v540
  %v580 = vunpack.c.l.b16 %v541
  %v581 = vunpack.c.l.b16 %v542
  %v582 = vunpack.c.l.b16 %v543
  %v583 = vunpack.c.l.b16 %v544
  %v584 = vunpack.c.l.b16 %v545
  %v585 = vunpack.c.l.b16 %v546
  %v586 = vunpack.c.l.b16 %v547
  %v587 = vunpack.c.l.b16 %v548
  %v588 = vunpack.c.l.b16 %v549
  %v589 = vunpack.c.l.b16 %v550
  %v590 = vpack.c.b16 %v575, %v574
  %v591 = vpack.c.b16 %v577, %v576
  %v592 = vpack.c.b16 %v579, %v578
  %v593 = vpack.c.b16 %v581, %v580
  %v594 = vpack.c.b16 %v583, %v582
  %v595 = vpack.c.b16 %v585, %v584
  %v596 = vpack.c.b16 %v587, %v586
  %v597 = vpack.c.b16 %v589, %v588
  %606 = vmatprep.subr.bf16.mxu0 0
  %607 = vmatpush1.bf16.msra.mxu0 %v590
  %608 = vmatprep.subr.bf16.mxu0 0
  %609 = vmatpush1.bf16.msra.mxu0 %v591
  %610 = vmatprep.subr.bf16.mxu0 0
  %611 = vmatpush1.bf16.msra.mxu0 %v592
  %612 = vmatprep.subr.bf16.mxu0 0
  %613 = vmatpush1.bf16.msra.mxu0 %v593
  %614 = vmatprep.subr.bf16.mxu0 0
  %615 = vmatpush1.bf16.msra.mxu0 %v594
  %616 = vmatprep.subr.bf16.mxu0 0
  %617 = vmatpush1.bf16.msra.mxu0 %v595
  %618 = vmatprep.subr.bf16.mxu0 0
  %619 = vmatpush1.bf16.msra.mxu0 %v596
  %620 = vmatprep.subr.bf16.mxu0 0
  %621 = vmatpush1.bf16.msra.mxu0 %v597
  %622 = vmatprep.subr.bf16.mxu0 0
  %623 = vmatpush1.bf16.msra.mxu0 0
  %624 = vmatprep.subr.bf16.mxu0 0
  %625 = vmatpush1.bf16.msra.mxu0 0
  %626 = vmatprep.subr.bf16.mxu0 0
  %627 = vmatpush1.bf16.msra.mxu0 0
  %628 = vmatprep.subr.bf16.mxu0 0
  %629 = vmatpush1.bf16.msra.mxu0 0
  %630 = vmatprep.subr.bf16.mxu0 0
  %631 = vmatpush1.bf16.msra.mxu0 0
  %632 = vmatprep.subr.bf16.mxu0 0
  %633 = vmatpush1.bf16.msra.mxu0 0
  %634 = vmatprep.subr.bf16.mxu0 0
  %635 = vmatpush1.bf16.msra.mxu0 0
  %636 = vmatprep.subr.bf16.mxu0 0
  %637 = vmatpush1.bf16.msra.mxu0 0
  %638 = vmatprep.mubr.bf16.mxu0 0
  %639 = vmatmul.mubr.bf16.gmra.mrb[0].mxu0 %v534
  %v640 = vpop.f32.mrb[0].mxu0
  %v641 = vadd.f32 %v556, %v640
  %v642 = vpop.f32.mrb[0].mxu0
  %v643 = vpop.f32.mrb[0].mxu0
  %v644 = vadd.f32 %v556, %v643
  %v645 = vpop.f32.mrb[0].mxu0
  %646 = vdwg.mxu0
  %v647 = vpack.c.bf16 %v644, %v641
  %v649 = vunpack.c.l.b16 %v647
  %v650 = vunpack.c.h.b16 %v647
  %v651 = vpack.c.b16 %v649, %v649
  %v652 = vpack.c.b16 %v650, %v650
  %655 = vst [vmem:[%s9] sm:$0xf] %v651
  %656 = vst [vmem:[%s9 + $0x4] sm:$0xf] %v652
  // Predicated region
  $region38: #{mbert_to_marian_forward.4} parent=0 // pred_check
    _
  $region39: #{mbert_to_marian_forward.4} parent=0 // pred_check_branch
    %658 = sbr.rel (0) target = $region41
  $region40: #{mbert_to_marian_forward.4} parent=0 // pred_region
    _
  $region41: #{mbert_to_marian_forward.4} parent=0 // pred_fallthru
    _
  // Predicated region
  $region42: #{mbert_to_marian_forward.4} parent=0 // pred_check
    _
  $region43: #{mbert_to_marian_forward.4} parent=0 // pred_check_branch
    %660 = sbr.rel (0) target = $region45
  $region44: #{mbert_to_marian_forward.4} parent=0 // pred_region
    _
  $region45: #{mbert_to_marian_forward.4} parent=0 // pred_fallthru
    _

</llo_original>
